<compile_context>
chip_gen: v7x
topology: tpu7x:2x2x1
jax: 0.10.0
libtpu: 0.0.40
codegen_flags: <defaults>
</compile_context>

<pallas_src>
import math

import jax
import jax.numpy as jnp
from jax import lax
from jax.experimental import pallas as pl
from jax.experimental.pallas import tpu as pltpu


# ----------------------------------------------------------------------------
# Single fused kernel: 2-layer LSTM over all timesteps + linear head +
# log-softmax.  Everything is VMEM-resident (total footprint < 150 KiB).
# ----------------------------------------------------------------------------
def _make_kernel(T, N, S, E, H, C):
    def kernel(xs_ref, w1_ref, b1_ref, w2_ref, b2_ref, wl_ref, bl_ref, o_ref):
        # Split the stacked layer-1 weight into input/hidden blocks.  These are
        # static sublane-aligned slices (E=64 and H=32 are multiples of 8).
        wih1 = w1_ref[0:E, :]            # (E, 4H)
        whh1 = w1_ref[E:E + H, :]        # (H, 4H)
        b1 = b1_ref[...]                 # (1, 4H)
        w2 = w2_ref[...]                 # (2H, 4H)
        b2 = b2_ref[...]                 # (1, 4H)

        # Hoist the layer-1 input projection out of the recurrence: a single
        # (T*N, E) @ (E, 4H) MXU pass instead of T tiny serial matmuls.
        gx1 = jnp.dot(xs_ref[...].reshape(T * N, E), wih1,
                      preferred_element_type=jnp.float32).reshape(T, N, 4 * H)

        # Lane mask selecting the tanh ("g") quadrant of a (N, 4H) gate tile.
        # Computed once and reused (JAX does not CSE broadcasts).
        lane = lax.broadcasted_iota(jnp.int32, (N, 4 * H), 1)
        g_mask = (lane >= 2 * H) & (lane < 3 * H)

        def activate(gates):
            # Two full-width EUP passes + one full-width select instead of
            # four narrow (N, 32) transcendental passes.
            return jnp.where(g_mask, jnp.tanh(gates), jax.nn.sigmoid(gates))

        def update(act, c):
            # PyTorch gate order: i, f, g, o.
            i_g = act[:, 0 * H:1 * H]
            f_g = act[:, 1 * H:2 * H]
            g_g = act[:, 2 * H:3 * H]
            o_g = act[:, 3 * H:4 * H]
            c_new = f_g * c + i_g * g_g
            h_new = o_g * jnp.tanh(c_new)
            return h_new, c_new

        h1 = jnp.zeros((N, H), jnp.float32)
        c1 = jnp.zeros((N, H), jnp.float32)
        h2 = jnp.zeros((N, H), jnp.float32)
        c2 = jnp.zeros((N, H), jnp.float32)

        # Fully unrolled recurrence (T is tiny): no per-step grid overhead and
        # the scheduler can overlap layer-2(t) with layer-1(t+1).
        for t in range(T):
            gates1 = (gx1[t]
                      + jnp.dot(h1, whh1, preferred_element_type=jnp.float32)
                      + b1)
            h1, c1 = update(activate(gates1), c1)

            z2 = jnp.concatenate([h1, h2], axis=-1)             # (N, 2H)
            gates2 = (jnp.dot(z2, w2, preferred_element_type=jnp.float32)
                      + b2)
            h2, c2 = update(activate(gates2), c2)

        # Fused head: (3S, H) last-step h2 -> (S, 3H) features -> linear ->
        # log_softmax, written straight to the (S, C) output.
        feats = jnp.concatenate([h2[0:S], h2[S:2 * S], h2[2 * S:3 * S]],
                                axis=-1)                        # (S, 3H)
        logits = (jnp.dot(feats, wl_ref[...],
                          preferred_element_type=jnp.float32) + bl_ref[...])
        m = jnp.max(logits, axis=-1, keepdims=True)
        shifted = logits - m
        lse = jnp.log(jnp.sum(jnp.exp(shifted), axis=-1, keepdims=True))
        o_ref[...] = (shifted - lse).astype(o_ref.dtype)

    return kernel


# ----------------------------------------------------------------------------
# Full forward (embedding gathers + weight stacking in the wrapper, the rest
# in a single Pallas kernel).
# ----------------------------------------------------------------------------
def triple_ngram_lstm_forward(x_n1, x_n2, x_n3, p):
    B, S = x_n1.shape
    E = p["embed_n1"].shape[1]
    H = p["whh1"].shape[0]
    C = p["w_lin"].shape[1]

    # TODO(synk): data-dependent embedding gather stays in the wrapper
    # (jnp.take) rather than a Pallas gather kernel.
    e1 = jnp.take(p["embed_n1"], x_n1, axis=0).reshape(S, B, E)
    e2 = jnp.take(p["embed_n2"], x_n2, axis=0).reshape(S, B, E)
    e3 = jnp.take(p["embed_n3"], x_n3, axis=0).reshape(S, B, E)

    # All three branches run through lstm_n1 (as in the original forward), so
    # batch them into one recurrence: N = 3*S sequences, T = B time steps.
    xs = jnp.concatenate([e1, e2, e3], axis=0)                  # (3S, B, E)
    xs_t = jnp.transpose(xs, (1, 0, 2))                         # (T, N, E)
    T, N = B, 3 * S

    # Stack [W_ih; W_hh] per layer: fewer refs, one fused matmul per cell.
    w1s = jnp.concatenate([p["wih1"], p["whh1"]], axis=0)       # (E+H, 4H)
    w2s = jnp.concatenate([p["wih2"], p["whh2"]], axis=0)       # (2H, 4H)

    kernel = _make_kernel(T, N, S, E, H, C)
    vmem = pl.BlockSpec(memory_space=pltpu.MemorySpace.VMEM)
    return pl.pallas_call(
        kernel,
        out_shape=jax.ShapeDtypeStruct((S, C), jnp.float32),
        in_specs=[vmem] * 7,
        out_specs=vmem,
    )(xs_t, w1s, p["b1"], w2s, p["b2"], p["w_lin"], p["b_lin"])


# ----------------------------------------------------------------------------
# Pure-JAX reference for validation.
# ----------------------------------------------------------------------------
def _cell_ref(x, h, c, wih, whh, b):
    g = x @ wih + h @ whh + b
    H = h.shape[-1]
    i = jax.nn.sigmoid(g[:, 0 * H:1 * H])
    f = jax.nn.sigmoid(g[:, 1 * H:2 * H])
    gg = jnp.tanh(g[:, 2 * H:3 * H])
    o = jax.nn.sigmoid(g[:, 3 * H:4 * H])
    c = f * c + i * gg
    h = o * jnp.tanh(c)
    return h, c


def _reference(x_n1, x_n2, x_n3, p):
    B, S = x_n1.shape
    E = p["embed_n1"].shape[1]
    H = p["whh1"].shape[0]

    def branch(tbl, idx):
        e = jnp.take(tbl, idx, axis=0).reshape(S, B, E)   # (N=S, T=B, E)
        h1 = c1 = h2 = c2 = jnp.zeros((S, H), jnp.float32)
        for t in range(B):
            h1, c1 = _cell_ref(e[:, t, :], h1, c1, p["wih1"], p["whh1"], p["b1"])
            h2, c2 = _cell_ref(h1, h2, c2, p["wih2"], p["whh2"], p["b2"])
        return h2

    feats = jnp.concatenate([branch(p["embed_n1"], x_n1),
                             branch(p["embed_n2"], x_n2),
                             branch(p["embed_n3"], x_n3)], axis=-1)
    logits = feats @ p["w_lin"] + p["b_lin"]
    return jax.nn.log_softmax(logits, axis=-1)


# ----------------------------------------------------------------------------
# Parameter construction + demo.
# ----------------------------------------------------------------------------
def init_params(key, emb=64, hidden=32, classes=16):
    ks = jax.random.split(key, 11)
    s = 1.0 / math.sqrt(hidden)
    sl = 1.0 / math.sqrt(3 * hidden)

    def u(k, shape, scale):
        return jax.random.uniform(k, shape, jnp.float32, -scale, scale)

    return dict(
        embed_n1=0.1 * jax.random.normal(ks[0], (26 ** 1 + 2, emb), jnp.float32),
        embed_n2=0.1 * jax.random.normal(ks[1], (26 ** 2 + 2, emb), jnp.float32),
        embed_n3=0.1 * jax.random.normal(ks[2], (26 ** 3 + 2, emb), jnp.float32),
        wih1=u(ks[3], (emb, 4 * hidden), s),
        whh1=u(ks[4], (hidden, 4 * hidden), s),
        b1=u(ks[5], (1, 4 * hidden), s),          # b_ih + b_hh combined
        wih2=u(ks[6], (hidden, 4 * hidden), s),
        whh2=u(ks[7], (hidden, 4 * hidden), s),
        b2=u(ks[8], (1, 4 * hidden), s),
        w_lin=u(ks[9], (3 * hidden, classes), sl),
        b_lin=u(ks[10], (1, classes), sl),
    )


if __name__ == "__main__":
    key = jax.random.PRNGKey(0)
    kp, k1, k2, k3 = jax.random.split(key, 4)

    B, S = 4, 8                      # (batch, n-gram sequence length)
    emb, hidden, classes = 64, 32, 16

    params = init_params(kp, emb=emb, hidden=hidden, classes=classes)
    x_n1 = jax.random.randint(k1, (B, S), 0, 26 ** 1 + 2, dtype=jnp.int32)
    x_n2 = jax.random.randint(k2, (B, S), 0, 26 ** 2 + 2, dtype=jnp.int32)
    x_n3 = jax.random.randint(k3, (B, S), 0, 26 ** 3 + 2, dtype=jnp.int32)

    out = triple_ngram_lstm_forward(x_n1, x_n2, x_n3, params)
    jax.block_until_ready(out)

    ref = _reference(x_n1, x_n2, x_n3, params)
    assert out.shape == (S, classes), out.shape
    assert jnp.allclose(out, ref, atol=2e-3, rtol=2e-3), \
        float(jnp.max(jnp.abs(out - ref)))
    print("KERNEL_OK")
</pallas_src>

<mosaic_0001>
module attributes {stable_mosaic.version = 11 : i64} {
  func.func @kernel(%arg0: memref<4x24x64xf32, #tpu.memory_space<vmem>>, %arg1: memref<96x128xf32, #tpu.memory_space<vmem>>, %arg2: memref<1x128xf32, #tpu.memory_space<vmem>>, %arg3: memref<64x128xf32, #tpu.memory_space<vmem>>, %arg4: memref<1x128xf32, #tpu.memory_space<vmem>>, %arg5: memref<96x16xf32, #tpu.memory_space<vmem>>, %arg6: memref<1x16xf32, #tpu.memory_space<vmem>>, %arg7: memref<8x16xf32, #tpu.memory_space<vmem>>) attributes {dimension_semantics = [], scalar_prefetch = 0 : i64, scratch_operands = 0 : i64, tpu.core_type = #tpu.core_type<tc>} {
    %c0 = arith.constant 0 : index
    %c0_0 = arith.constant 0 : index
    %0 = vector.load %arg1[%c0, %c0_0] : memref<96x128xf32, #tpu.memory_space<vmem>>, vector<64x128xf32>
    %c64 = arith.constant 64 : index
    %c0_1 = arith.constant 0 : index
    %1 = vector.load %arg1[%c64, %c0_1] : memref<96x128xf32, #tpu.memory_space<vmem>>, vector<32x128xf32>
    %c0_2 = arith.constant 0 : index
    %c0_3 = arith.constant 0 : index
    %2 = vector.load %arg2[%c0_2, %c0_3] : memref<1x128xf32, #tpu.memory_space<vmem>>, vector<1x128xf32>
    %c0_4 = arith.constant 0 : index
    %c0_5 = arith.constant 0 : index
    %3 = vector.load %arg3[%c0_4, %c0_5] : memref<64x128xf32, #tpu.memory_space<vmem>>, vector<64x128xf32>
    %c0_6 = arith.constant 0 : index
    %c0_7 = arith.constant 0 : index
    %4 = vector.load %arg4[%c0_6, %c0_7] : memref<1x128xf32, #tpu.memory_space<vmem>>, vector<1x128xf32>
    %c0_8 = arith.constant 0 : index
    %c0_9 = arith.constant 0 : index
    %c0_10 = arith.constant 0 : index
    %5 = vector.load %arg0[%c0_8, %c0_9, %c0_10] : memref<4x24x64xf32, #tpu.memory_space<vmem>>, vector<4x24x64xf32>
    %6 = vector.shape_cast %5 : vector<4x24x64xf32> to vector<96x64xf32>
    %cst = arith.constant dense<0.000000e+00> : vector<96x128xf32>
    %7 = tpu.matmul %6, %0, %cst {dimension_numbers = #tpu.dot_dimension_numbers<[1], [0], [0], [1], [0, 0, 1, 1], [], []>} : vector<96x64xf32>, vector<64x128xf32>, vector<96x128xf32> -> vector<96x128xf32>
    %8 = vector.shape_cast %7 : vector<96x128xf32> to vector<4x24x128xf32>
    %9 = tpu.iota {dimensions = array<i32: 1>} : vector<24x128xi32>
    %c64_i32 = arith.constant 64 : i32
    %10 = vector.broadcast %c64_i32 : i32 to vector<24x128xi32>
    %11 = arith.cmpi sge, %9, %10 : vector<24x128xi32>
    %c96_i32 = arith.constant 96 : i32
    %12 = vector.broadcast %c96_i32 : i32 to vector<24x128xi32>
    %13 = arith.cmpi slt, %9, %12 : vector<24x128xi32>
    %14 = arith.andi %11, %13 : vector<24x128xi1>
    %cst_11 = arith.constant 0.000000e+00 : f32
    %15 = vector.broadcast %cst_11 : f32 to vector<24x32xf32>
    %cst_12 = arith.constant 0.000000e+00 : f32
    %16 = vector.broadcast %cst_12 : f32 to vector<24x32xf32>
    %cst_13 = arith.constant 0.000000e+00 : f32
    %17 = vector.broadcast %cst_13 : f32 to vector<24x32xf32>
    %cst_14 = arith.constant 0.000000e+00 : f32
    %18 = vector.broadcast %cst_14 : f32 to vector<24x32xf32>
    %19 = vector.extract_strided_slice %8 {offsets = [0, 0, 0], sizes = [1, 24, 128], strides = [1, 1, 1]} : vector<4x24x128xf32> to vector<1x24x128xf32>
    %20 = vector.shape_cast %19 : vector<1x24x128xf32> to vector<24x128xf32>
    %cst_15 = arith.constant dense<0.000000e+00> : vector<24x128xf32>
    %21 = tpu.matmul %15, %1, %cst_15 {dimension_numbers = #tpu.dot_dimension_numbers<[1], [0], [0], [1], [0, 0, 1, 1], [], []>} : vector<24x32xf32>, vector<32x128xf32>, vector<24x128xf32> -> vector<24x128xf32>
    %22 = arith.addf %20, %21 : vector<24x128xf32>
    %23 = vector.broadcast %2 : vector<1x128xf32> to vector<24x128xf32>
    %24 = arith.addf %22, %23 : vector<24x128xf32>
    %25 = math.tanh %24 : vector<24x128xf32>
    %26 = arith.negf %24 : vector<24x128xf32>
    %27 = math.exp %26 : vector<24x128xf32>
    %cst_16 = arith.constant 1.000000e+00 : f32
    %28 = vector.broadcast %cst_16 : f32 to vector<24x128xf32>
    %29 = arith.addf %28, %27 : vector<24x128xf32>
    %30 = arith.divf %28, %29 : vector<24x128xf32>
    %31 = arith.select %14, %25, %30 : vector<24x128xi1>, vector<24x128xf32>
    %32 = vector.extract_strided_slice %31 {offsets = [0, 0], sizes = [24, 32], strides = [1, 1]} : vector<24x128xf32> to vector<24x32xf32>
    %33 = vector.extract_strided_slice %31 {offsets = [0, 32], sizes = [24, 32], strides = [1, 1]} : vector<24x128xf32> to vector<24x32xf32>
    %34 = vector.extract_strided_slice %31 {offsets = [0, 64], sizes = [24, 32], strides = [1, 1]} : vector<24x128xf32> to vector<24x32xf32>
    %35 = vector.extract_strided_slice %31 {offsets = [0, 96], sizes = [24, 32], strides = [1, 1]} : vector<24x128xf32> to vector<24x32xf32>
    %36 = arith.mulf %33, %16 : vector<24x32xf32>
    %37 = arith.mulf %32, %34 : vector<24x32xf32>
    %38 = arith.addf %36, %37 : vector<24x32xf32>
    %39 = math.tanh %38 : vector<24x32xf32>
    %40 = arith.mulf %35, %39 : vector<24x32xf32>
    %41 = tpu.concatenate %40, %17 in 1 : vector<24x32xf32>, vector<24x32xf32> -> vector<24x64xf32>
    %cst_17 = arith.constant dense<0.000000e+00> : vector<24x128xf32>
    %42 = tpu.matmul %41, %3, %cst_17 {dimension_numbers = #tpu.dot_dimension_numbers<[1], [0], [0], [1], [0, 0, 1, 1], [], []>} : vector<24x64xf32>, vector<64x128xf32>, vector<24x128xf32> -> vector<24x128xf32>
    %43 = vector.broadcast %4 : vector<1x128xf32> to vector<24x128xf32>
    %44 = arith.addf %42, %43 : vector<24x128xf32>
    %45 = math.tanh %44 : vector<24x128xf32>
    %46 = arith.negf %44 : vector<24x128xf32>
    %47 = math.exp %46 : vector<24x128xf32>
    %cst_18 = arith.constant 1.000000e+00 : f32
    %48 = vector.broadcast %cst_18 : f32 to vector<24x128xf32>
    %49 = arith.addf %48, %47 : vector<24x128xf32>
    %50 = arith.divf %48, %49 : vector<24x128xf32>
    %51 = arith.select %14, %45, %50 : vector<24x128xi1>, vector<24x128xf32>
    %52 = vector.extract_strided_slice %51 {offsets = [0, 0], sizes = [24, 32], strides = [1, 1]} : vector<24x128xf32> to vector<24x32xf32>
    %53 = vector.extract_strided_slice %51 {offsets = [0, 32], sizes = [24, 32], strides = [1, 1]} : vector<24x128xf32> to vector<24x32xf32>
    %54 = vector.extract_strided_slice %51 {offsets = [0, 64], sizes = [24, 32], strides = [1, 1]} : vector<24x128xf32> to vector<24x32xf32>
    %55 = vector.extract_strided_slice %51 {offsets = [0, 96], sizes = [24, 32], strides = [1, 1]} : vector<24x128xf32> to vector<24x32xf32>
    %56 = arith.mulf %53, %18 : vector<24x32xf32>
    %57 = arith.mulf %52, %54 : vector<24x32xf32>
    %58 = arith.addf %56, %57 : vector<24x32xf32>
    %59 = math.tanh %58 : vector<24x32xf32>
    %60 = arith.mulf %55, %59 : vector<24x32xf32>
    %61 = vector.extract_strided_slice %8 {offsets = [1, 0, 0], sizes = [1, 24, 128], strides = [1, 1, 1]} : vector<4x24x128xf32> to vector<1x24x128xf32>
    %62 = vector.shape_cast %61 : vector<1x24x128xf32> to vector<24x128xf32>
    %cst_19 = arith.constant dense<0.000000e+00> : vector<24x128xf32>
    %63 = tpu.matmul %40, %1, %cst_19 {dimension_numbers = #tpu.dot_dimension_numbers<[1], [0], [0], [1], [0, 0, 1, 1], [], []>} : vector<24x32xf32>, vector<32x128xf32>, vector<24x128xf32> -> vector<24x128xf32>
    %64 = arith.addf %62, %63 : vector<24x128xf32>
    %65 = vector.broadcast %2 : vector<1x128xf32> to vector<24x128xf32>
    %66 = arith.addf %64, %65 : vector<24x128xf32>
    %67 = math.tanh %66 : vector<24x128xf32>
    %68 = arith.negf %66 : vector<24x128xf32>
    %69 = math.exp %68 : vector<24x128xf32>
    %cst_20 = arith.constant 1.000000e+00 : f32
    %70 = vector.broadcast %cst_20 : f32 to vector<24x128xf32>
    %71 = arith.addf %70, %69 : vector<24x128xf32>
    %72 = arith.divf %70, %71 : vector<24x128xf32>
    %73 = arith.select %14, %67, %72 : vector<24x128xi1>, vector<24x128xf32>
    %74 = vector.extract_strided_slice %73 {offsets = [0, 0], sizes = [24, 32], strides = [1, 1]} : vector<24x128xf32> to vector<24x32xf32>
    %75 = vector.extract_strided_slice %73 {offsets = [0, 32], sizes = [24, 32], strides = [1, 1]} : vector<24x128xf32> to vector<24x32xf32>
    %76 = vector.extract_strided_slice %73 {offsets = [0, 64], sizes = [24, 32], strides = [1, 1]} : vector<24x128xf32> to vector<24x32xf32>
    %77 = vector.extract_strided_slice %73 {offsets = [0, 96], sizes = [24, 32], strides = [1, 1]} : vector<24x128xf32> to vector<24x32xf32>
    %78 = arith.mulf %75, %38 : vector<24x32xf32>
    %79 = arith.mulf %74, %76 : vector<24x32xf32>
    %80 = arith.addf %78, %79 : vector<24x32xf32>
    %81 = math.tanh %80 : vector<24x32xf32>
    %82 = arith.mulf %77, %81 : vector<24x32xf32>
    %83 = tpu.concatenate %82, %60 in 1 : vector<24x32xf32>, vector<24x32xf32> -> vector<24x64xf32>
    %cst_21 = arith.constant dense<0.000000e+00> : vector<24x128xf32>
    %84 = tpu.matmul %83, %3, %cst_21 {dimension_numbers = #tpu.dot_dimension_numbers<[1], [0], [0], [1], [0, 0, 1, 1], [], []>} : vector<24x64xf32>, vector<64x128xf32>, vector<24x128xf32> -> vector<24x128xf32>
    %85 = vector.broadcast %4 : vector<1x128xf32> to vector<24x128xf32>
    %86 = arith.addf %84, %85 : vector<24x128xf32>
    %87 = math.tanh %86 : vector<24x128xf32>
    %88 = arith.negf %86 : vector<24x128xf32>
    %89 = math.exp %88 : vector<24x128xf32>
    %cst_22 = arith.constant 1.000000e+00 : f32
    %90 = vector.broadcast %cst_22 : f32 to vector<24x128xf32>
    %91 = arith.addf %90, %89 : vector<24x128xf32>
    %92 = arith.divf %90, %91 : vector<24x128xf32>
    %93 = arith.select %14, %87, %92 : vector<24x128xi1>, vector<24x128xf32>
    %94 = vector.extract_strided_slice %93 {offsets = [0, 0], sizes = [24, 32], strides = [1, 1]} : vector<24x128xf32> to vector<24x32xf32>
    %95 = vector.extract_strided_slice %93 {offsets = [0, 32], sizes = [24, 32], strides = [1, 1]} : vector<24x128xf32> to vector<24x32xf32>
    %96 = vector.extract_strided_slice %93 {offsets = [0, 64], sizes = [24, 32], strides = [1, 1]} : vector<24x128xf32> to vector<24x32xf32>
    %97 = vector.extract_strided_slice %93 {offsets = [0, 96], sizes = [24, 32], strides = [1, 1]} : vector<24x128xf32> to vector<24x32xf32>
    %98 = arith.mulf %95, %58 : vector<24x32xf32>
    %99 = arith.mulf %94, %96 : vector<24x32xf32>
    %100 = arith.addf %98, %99 : vector<24x32xf32>
    %101 = math.tanh %100 : vector<24x32xf32>
    %102 = arith.mulf %97, %101 : vector<24x32xf32>
    %103 = vector.extract_strided_slice %8 {offsets = [2, 0, 0], sizes = [1, 24, 128], strides = [1, 1, 1]} : vector<4x24x128xf32> to vector<1x24x128xf32>
    %104 = vector.shape_cast %103 : vector<1x24x128xf32> to vector<24x128xf32>
    %cst_23 = arith.constant dense<0.000000e+00> : vector<24x128xf32>
    %105 = tpu.matmul %82, %1, %cst_23 {dimension_numbers = #tpu.dot_dimension_numbers<[1], [0], [0], [1], [0, 0, 1, 1], [], []>} : vector<24x32xf32>, vector<32x128xf32>, vector<24x128xf32> -> vector<24x128xf32>
    %106 = arith.addf %104, %105 : vector<24x128xf32>
    %107 = vector.broadcast %2 : vector<1x128xf32> to vector<24x128xf32>
    %108 = arith.addf %106, %107 : vector<24x128xf32>
    %109 = math.tanh %108 : vector<24x128xf32>
    %110 = arith.negf %108 : vector<24x128xf32>
    %111 = math.exp %110 : vector<24x128xf32>
    %cst_24 = arith.constant 1.000000e+00 : f32
    %112 = vector.broadcast %cst_24 : f32 to vector<24x128xf32>
    %113 = arith.addf %112, %111 : vector<24x128xf32>
    %114 = arith.divf %112, %113 : vector<24x128xf32>
    %115 = arith.select %14, %109, %114 : vector<24x128xi1>, vector<24x128xf32>
    %116 = vector.extract_strided_slice %115 {offsets = [0, 0], sizes = [24, 32], strides = [1, 1]} : vector<24x128xf32> to vector<24x32xf32>
    %117 = vector.extract_strided_slice %115 {offsets = [0, 32], sizes = [24, 32], strides = [1, 1]} : vector<24x128xf32> to vector<24x32xf32>
    %118 = vector.extract_strided_slice %115 {offsets = [0, 64], sizes = [24, 32], strides = [1, 1]} : vector<24x128xf32> to vector<24x32xf32>
    %119 = vector.extract_strided_slice %115 {offsets = [0, 96], sizes = [24, 32], strides = [1, 1]} : vector<24x128xf32> to vector<24x32xf32>
    %120 = arith.mulf %117, %80 : vector<24x32xf32>
    %121 = arith.mulf %116, %118 : vector<24x32xf32>
    %122 = arith.addf %120, %121 : vector<24x32xf32>
    %123 = math.tanh %122 : vector<24x32xf32>
    %124 = arith.mulf %119, %123 : vector<24x32xf32>
    %125 = tpu.concatenate %124, %102 in 1 : vector<24x32xf32>, vector<24x32xf32> -> vector<24x64xf32>
    %cst_25 = arith.constant dense<0.000000e+00> : vector<24x128xf32>
    %126 = tpu.matmul %125, %3, %cst_25 {dimension_numbers = #tpu.dot_dimension_numbers<[1], [0], [0], [1], [0, 0, 1, 1], [], []>} : vector<24x64xf32>, vector<64x128xf32>, vector<24x128xf32> -> vector<24x128xf32>
    %127 = vector.broadcast %4 : vector<1x128xf32> to vector<24x128xf32>
    %128 = arith.addf %126, %127 : vector<24x128xf32>
    %129 = math.tanh %128 : vector<24x128xf32>
    %130 = arith.negf %128 : vector<24x128xf32>
    %131 = math.exp %130 : vector<24x128xf32>
    %cst_26 = arith.constant 1.000000e+00 : f32
    %132 = vector.broadcast %cst_26 : f32 to vector<24x128xf32>
    %133 = arith.addf %132, %131 : vector<24x128xf32>
    %134 = arith.divf %132, %133 : vector<24x128xf32>
    %135 = arith.select %14, %129, %134 : vector<24x128xi1>, vector<24x128xf32>
    %136 = vector.extract_strided_slice %135 {offsets = [0, 0], sizes = [24, 32], strides = [1, 1]} : vector<24x128xf32> to vector<24x32xf32>
    %137 = vector.extract_strided_slice %135 {offsets = [0, 32], sizes = [24, 32], strides = [1, 1]} : vector<24x128xf32> to vector<24x32xf32>
    %138 = vector.extract_strided_slice %135 {offsets = [0, 64], sizes = [24, 32], strides = [1, 1]} : vector<24x128xf32> to vector<24x32xf32>
    %139 = vector.extract_strided_slice %135 {offsets = [0, 96], sizes = [24, 32], strides = [1, 1]} : vector<24x128xf32> to vector<24x32xf32>
    %140 = arith.mulf %137, %100 : vector<24x32xf32>
    %141 = arith.mulf %136, %138 : vector<24x32xf32>
    %142 = arith.addf %140, %141 : vector<24x32xf32>
    %143 = math.tanh %142 : vector<24x32xf32>
    %144 = arith.mulf %139, %143 : vector<24x32xf32>
    %145 = vector.extract_strided_slice %8 {offsets = [3, 0, 0], sizes = [1, 24, 128], strides = [1, 1, 1]} : vector<4x24x128xf32> to vector<1x24x128xf32>
    %146 = vector.shape_cast %145 : vector<1x24x128xf32> to vector<24x128xf32>
    %cst_27 = arith.constant dense<0.000000e+00> : vector<24x128xf32>
    %147 = tpu.matmul %124, %1, %cst_27 {dimension_numbers = #tpu.dot_dimension_numbers<[1], [0], [0], [1], [0, 0, 1, 1], [], []>} : vector<24x32xf32>, vector<32x128xf32>, vector<24x128xf32> -> vector<24x128xf32>
    %148 = arith.addf %146, %147 : vector<24x128xf32>
    %149 = vector.broadcast %2 : vector<1x128xf32> to vector<24x128xf32>
    %150 = arith.addf %148, %149 : vector<24x128xf32>
    %151 = math.tanh %150 : vector<24x128xf32>
    %152 = arith.negf %150 : vector<24x128xf32>
    %153 = math.exp %152 : vector<24x128xf32>
    %cst_28 = arith.constant 1.000000e+00 : f32
    %154 = vector.broadcast %cst_28 : f32 to vector<24x128xf32>
    %155 = arith.addf %154, %153 : vector<24x128xf32>
    %156 = arith.divf %154, %155 : vector<24x128xf32>
    %157 = arith.select %14, %151, %156 : vector<24x128xi1>, vector<24x128xf32>
    %158 = vector.extract_strided_slice %157 {offsets = [0, 0], sizes = [24, 32], strides = [1, 1]} : vector<24x128xf32> to vector<24x32xf32>
    %159 = vector.extract_strided_slice %157 {offsets = [0, 32], sizes = [24, 32], strides = [1, 1]} : vector<24x128xf32> to vector<24x32xf32>
    %160 = vector.extract_strided_slice %157 {offsets = [0, 64], sizes = [24, 32], strides = [1, 1]} : vector<24x128xf32> to vector<24x32xf32>
    %161 = vector.extract_strided_slice %157 {offsets = [0, 96], sizes = [24, 32], strides = [1, 1]} : vector<24x128xf32> to vector<24x32xf32>
    %162 = arith.mulf %159, %122 : vector<24x32xf32>
    %163 = arith.mulf %158, %160 : vector<24x32xf32>
    %164 = arith.addf %162, %163 : vector<24x32xf32>
    %165 = math.tanh %164 : vector<24x32xf32>
    %166 = arith.mulf %161, %165 : vector<24x32xf32>
    %167 = tpu.concatenate %166, %144 in 1 : vector<24x32xf32>, vector<24x32xf32> -> vector<24x64xf32>
    %cst_29 = arith.constant dense<0.000000e+00> : vector<24x128xf32>
    %168 = tpu.matmul %167, %3, %cst_29 {dimension_numbers = #tpu.dot_dimension_numbers<[1], [0], [0], [1], [0, 0, 1, 1], [], []>} : vector<24x64xf32>, vector<64x128xf32>, vector<24x128xf32> -> vector<24x128xf32>
    %169 = vector.broadcast %4 : vector<1x128xf32> to vector<24x128xf32>
    %170 = arith.addf %168, %169 : vector<24x128xf32>
    %171 = math.tanh %170 : vector<24x128xf32>
    %172 = arith.negf %170 : vector<24x128xf32>
    %173 = math.exp %172 : vector<24x128xf32>
    %cst_30 = arith.constant 1.000000e+00 : f32
    %174 = vector.broadcast %cst_30 : f32 to vector<24x128xf32>
    %175 = arith.addf %174, %173 : vector<24x128xf32>
    %176 = arith.divf %174, %175 : vector<24x128xf32>
    %177 = arith.select %14, %171, %176 : vector<24x128xi1>, vector<24x128xf32>
    %178 = vector.extract_strided_slice %177 {offsets = [0, 0], sizes = [24, 32], strides = [1, 1]} : vector<24x128xf32> to vector<24x32xf32>
    %179 = vector.extract_strided_slice %177 {offsets = [0, 32], sizes = [24, 32], strides = [1, 1]} : vector<24x128xf32> to vector<24x32xf32>
    %180 = vector.extract_strided_slice %177 {offsets = [0, 64], sizes = [24, 32], strides = [1, 1]} : vector<24x128xf32> to vector<24x32xf32>
    %181 = vector.extract_strided_slice %177 {offsets = [0, 96], sizes = [24, 32], strides = [1, 1]} : vector<24x128xf32> to vector<24x32xf32>
    %182 = arith.mulf %179, %142 : vector<24x32xf32>
    %183 = arith.mulf %178, %180 : vector<24x32xf32>
    %184 = arith.addf %182, %183 : vector<24x32xf32>
    %185 = math.tanh %184 : vector<24x32xf32>
    %186 = arith.mulf %181, %185 : vector<24x32xf32>
    %187 = vector.extract_strided_slice %186 {offsets = [0, 0], sizes = [8, 32], strides = [1, 1]} : vector<24x32xf32> to vector<8x32xf32>
    %188 = vector.extract_strided_slice %186 {offsets = [8, 0], sizes = [8, 32], strides = [1, 1]} : vector<24x32xf32> to vector<8x32xf32>
    %189 = vector.extract_strided_slice %186 {offsets = [16, 0], sizes = [8, 32], strides = [1, 1]} : vector<24x32xf32> to vector<8x32xf32>
    %190 = tpu.concatenate %187, %188, %189 in 1 : vector<8x32xf32>, vector<8x32xf32>, vector<8x32xf32> -> vector<8x96xf32>
    %c0_31 = arith.constant 0 : index
    %c0_32 = arith.constant 0 : index
    %191 = vector.load %arg5[%c0_31, %c0_32] : memref<96x16xf32, #tpu.memory_space<vmem>>, vector<96x16xf32>
    %cst_33 = arith.constant dense<0.000000e+00> : vector<8x16xf32>
    %192 = tpu.matmul %190, %191, %cst_33 {dimension_numbers = #tpu.dot_dimension_numbers<[1], [0], [0], [1], [0, 0, 1, 1], [], []>} : vector<8x96xf32>, vector<96x16xf32>, vector<8x16xf32> -> vector<8x16xf32>
    %c0_34 = arith.constant 0 : index
    %c0_35 = arith.constant 0 : index
    %193 = vector.load %arg6[%c0_34, %c0_35] : memref<1x16xf32, #tpu.memory_space<vmem>>, vector<1x16xf32>
    %194 = vector.broadcast %193 : vector<1x16xf32> to vector<8x16xf32>
    %195 = arith.addf %192, %194 : vector<8x16xf32>
    %cst_36 = arith.constant dense<0xFF800000> : vector<8xf32>
    %196 = vector.multi_reduction <maximumf>, %195, %cst_36 [1] : vector<8x16xf32> to vector<8xf32>
    %197 = vector.shape_cast %196 : vector<8xf32> to vector<8x1xf32>
    %198 = vector.broadcast %197 : vector<8x1xf32> to vector<8x16xf32>
    %199 = arith.subf %195, %198 : vector<8x16xf32>
    %200 = math.exp %199 : vector<8x16xf32>
    %cst_37 = arith.constant dense<0.000000e+00> : vector<8xf32>
    %201 = vector.multi_reduction <add>, %200, %cst_37 [1] : vector<8x16xf32> to vector<8xf32>
    %202 = vector.shape_cast %201 : vector<8xf32> to vector<8x1xf32>
    %203 = math.log %202 : vector<8x1xf32>
    %204 = vector.broadcast %203 : vector<8x1xf32> to vector<8x16xf32>
    %205 = arith.subf %199, %204 : vector<8x16xf32>
    %c0_38 = arith.constant 0 : index
    %c0_39 = arith.constant 0 : index
    %206 = vector.load %arg7[%c0_38, %c0_39] : memref<8x16xf32, #tpu.memory_space<vmem>>, vector<8x16xf32>
    tpu.vector_store %arg7[%c0_38, %c0_39], %205 {strides = array<i32>} : memref<8x16xf32, #tpu.memory_space<vmem>>, vector<8x16xf32>,
    return
  }
}

</mosaic_0001>

<llo_original>
// kernel: tpu_custom_call.1
$region0: #{tpu_custom_call.1}
  #allocation0 [shape = 'u32[]', space=smem, size = 0x4, offset = 0x4, fixed_abs, tag = 'smem constant byte address 0x4 - core index']
  #allocation1 [shape = 'u32[144,128]{1,0:T(1,128)}', space=vmem, size = 0x12000, scoped, tag = 'internal scratch']
  %s0 = inlined_call_operand.vmem [shape: f32[4,24,64], index: 0, kind: input, shape index: {}]
  %s1 = inlined_call_operand.hbm [shape: f32[96,128], index: 1, kind: input, shape index: {}]
  %s2 = inlined_call_operand.vmem [shape: f32[1,128], index: 2, kind: input, shape index: {}]
  %s3 = inlined_call_operand.hbm [shape: f32[64,128], index: 3, kind: input, shape index: {}]
  %s4 = inlined_call_operand.vmem [shape: f32[1,128], index: 4, kind: input, shape index: {}]
  %s5 = inlined_call_operand.vmem [shape: f32[96,16], index: 5, kind: input, shape index: {}]
  %s6 = inlined_call_operand.vmem [shape: f32[1,16], index: 6, kind: input, shape index: {}]
  %s7 = inlined_call_operand.hbm [shape: f32[8,16], index: 7, kind: output, shape index: {}]
  %s8 = sld [smem:[#allocation0]]
  $region46: #{tpu_custom_call.1} parent=0
    _
  %s10 = ssub.s32 1, %s8
  %s11 = scalar_select 0, %s10, %s8
  $region1: #{tpu_custom_call.1} parent=0
    #allocation2 [shape = 'u8[49152]{0}', space=vmem, size = 0xc000, scoped, tag = 'input window, operand 1, single buffered']
    #allocation3 [shape = 's32[1]{0}', space=sflag, size = 0x4, scoped, tag = 'scoped memory for tpu_custom_call.1']
    #allocation4 [shape = 's32[1]{0}', space=sflag, size = 0x4, scoped, tag = 'scoped memory for tpu_custom_call.1']
    #allocation5 [shape = 'u8[32768]{0}', space=vmem, size = 0x8000, scoped, tag = 'input window, operand 3, single buffered']
    #allocation6 [shape = 's32[1]{0}', space=sflag, size = 0x4, scoped, tag = 'scoped memory for tpu_custom_call.1']
    #allocation7 [shape = 'u8[4096]{0}', space=vmem, size = 0x1000, scoped, tag = 'output window, operand 0, single buffered']
    %12 = vsyncpa [#allocation3], 0
    %13 = vsyncpa [#allocation6], 0
    %14 = vsyncpa [#allocation4], 0
    // Predicated region
    $region2: #{tpu_custom_call.1} parent=1 // pred_check
      _
    $region3: #{tpu_custom_call.1} parent=1 // pred_check_branch
      %16 = sbr.rel (0) target = $region5
    $region4: #{tpu_custom_call.1} parent=1 // pred_region
      _
    $region5: #{tpu_custom_call.1} parent=1 // pred_fallthru
      _
    // Predicated region
    $region6: #{tpu_custom_call.1} parent=1 // pred_check
      _
    $region7: #{tpu_custom_call.1} parent=1 // pred_check_branch
      %18 = sbr.rel (0) target = $region9
    $region8: #{tpu_custom_call.1} parent=1 // pred_region
      %s20 = ssub.s32 1536, 1536
      %21 = vsyncadd [#allocation3], %s20
      %s22 = sshll.u32 [#allocation2], 4
      %s23 = int_to_ptr.vmem [resolvable:$true] %s22
      %28 = dma.hbm_to_vmem [thread:$0]  %s1, 1536, %s23, [#allocation3], 128, 128, 8
    $region9: #{tpu_custom_call.1} parent=1 // pred_fallthru
      _
    // Predicated region
    $region10: #{tpu_custom_call.1} parent=1 // pred_check
      _
    $region11: #{tpu_custom_call.1} parent=1 // pred_check_branch
      %30 = sbr.rel (0) target = $region13
    $region12: #{tpu_custom_call.1} parent=1 // pred_region
      _
    $region13: #{tpu_custom_call.1} parent=1 // pred_fallthru
      _
    // Predicated region
    $region14: #{tpu_custom_call.1} parent=1 // pred_check
      _
    $region15: #{tpu_custom_call.1} parent=1 // pred_check_branch
      %32 = sbr.rel (0) target = $region17
    $region16: #{tpu_custom_call.1} parent=1 // pred_region
      %s34 = ssub.s32 1024, 1024
      %35 = vsyncadd [#allocation6], %s34
      %s36 = sshll.u32 [#allocation5], 4
      %s37 = int_to_ptr.vmem [resolvable:$true] %s36
      %42 = dma.hbm_to_vmem [thread:$0]  %s3, 1024, %s37, [#allocation6], 128, 128, 8
    $region17: #{tpu_custom_call.1} parent=1 // pred_fallthru
      _
    // Predicated region
    $region18: #{tpu_custom_call.1} parent=1 // pred_check
      _
    $region19: #{tpu_custom_call.1} parent=1 // pred_check_branch
      %44 = sbr.rel (0) target = $region21
    $region20: #{tpu_custom_call.1} parent=1 // pred_region
      _
    $region21: #{tpu_custom_call.1} parent=1 // pred_fallthru
      _
    // Predicated region
    $region22: #{tpu_custom_call.1} parent=1 // pred_check
      _
    $region23: #{tpu_custom_call.1} parent=1 // pred_check_branch
      %46 = sbr.rel (0) target = $region25
    $region24: #{tpu_custom_call.1} parent=1 // pred_region
      _
    $region25: #{tpu_custom_call.1} parent=1 // pred_fallthru
      _
    // Predicated region
    $region26: #{tpu_custom_call.1} parent=1 // pred_check
      _
    $region27: #{tpu_custom_call.1} parent=1 // pred_check_branch
      %48 = sbr.rel (0) target = $region29
    $region28: #{tpu_custom_call.1} parent=1 // pred_region
      _
    $region29: #{tpu_custom_call.1} parent=1 // pred_fallthru
      _
    // Predicated region
    $region30: #{tpu_custom_call.1} parent=1 // pred_check
      _
    $region31: #{tpu_custom_call.1} parent=1 // pred_check_branch
      %50 = sbr.rel (0) target = $region33
    $region32: #{tpu_custom_call.1} parent=1 // pred_region
      %51 = dma.done [#allocation3], 1536
    $region33: #{tpu_custom_call.1} parent=1 // pred_fallthru
      _
    // Predicated region
    $region34: #{tpu_custom_call.1} parent=1 // pred_check
      _
    $region35: #{tpu_custom_call.1} parent=1 // pred_check_branch
      %53 = sbr.rel (0) target = $region37
    $region36: #{tpu_custom_call.1} parent=1 // pred_region
      %54 = dma.done [#allocation6], 1024
    $region37: #{tpu_custom_call.1} parent=1 // pred_fallthru
      _
    %v55 = vld [vmem:[#allocation2] sm:$0xff]
    %v56 = vld [vmem:[#allocation2 + $0x8] sm:$0xff]
    %v57 = vld [vmem:[#allocation2 + $0x10] sm:$0xff]
    %v58 = vld [vmem:[#allocation2 + $0x18] sm:$0xff]
    %v59 = vld [vmem:[#allocation2 + $0x20] sm:$0xff]
    %v60 = vld [vmem:[#allocation2 + $0x28] sm:$0xff]
    %v61 = vld [vmem:[#allocation2 + $0x30] sm:$0xff]
    %v62 = vld [vmem:[#allocation2 + $0x38] sm:$0xff]
    %v63 = vld [vmem:[#allocation2 + $0x40] sm:$0xff]
    %v64 = vld [vmem:[#allocation2 + $0x48] sm:$0xff]
    %v65 = vld [vmem:[#allocation2 + $0x50] sm:$0xff]
    %v66 = vld [vmem:[#allocation2 + $0x58] sm:$0xff]
    %v67 = vld [vmem:[%s2] sm:$0x1]
    %v68 = vld [vmem:[#allocation5] sm:$0xff]
    %v69 = vld [vmem:[#allocation5 + $0x8] sm:$0xff]
    %v70 = vld [vmem:[#allocation5 + $0x10] sm:$0xff]
    %v71 = vld [vmem:[#allocation5 + $0x18] sm:$0xff]
    %v72 = vld [vmem:[#allocation5 + $0x20] sm:$0xff]
    %v73 = vld [vmem:[#allocation5 + $0x28] sm:$0xff]
    %v74 = vld [vmem:[#allocation5 + $0x30] sm:$0xff]
    %v75 = vld [vmem:[#allocation5 + $0x38] sm:$0xff]
    %v76 = vld [vmem:[%s4] sm:$0x1]
    %v77 = vld [vmem:[%s0] sm:$0xff]
    %v78 = vld [vmem:[%s0 + $0x8] sm:$0xff]
    %v79 = vld [vmem:[%s0 + $0x10] sm:$0xff]
    %v80 = vld [vmem:[%s0 + $0x18] sm:$0xff]
    %v81 = vld [vmem:[%s0 + $0x20] sm:$0xff]
    %v82 = vld [vmem:[%s0 + $0x28] sm:$0xff]
    %v83 = vld [vmem:[%s0 + $0x30] sm:$0xff]
    %v84 = vld [vmem:[%s0 + $0x38] sm:$0xff]
    %v85 = vld [vmem:[%s0 + $0x40] sm:$0xff]
    %v86 = vld [vmem:[%s0 + $0x48] sm:$0xff]
    %v87 = vld [vmem:[%s0 + $0x50] sm:$0xff]
    %v88 = vld [vmem:[%s0 + $0x58] sm:$0xff]
    %vm89 = vcmask 523264
    %v91 = vsel %vm89, %v77, 0
    %v94 = vsel %vm89, %v78, 0
    %v97 = vsel %vm89, %v79, 0
    %v100 = vsel %vm89, %v80, 0
    %v103 = vsel %vm89, %v81, 0
    %v106 = vsel %vm89, %v82, 0
    %v109 = vsel %vm89, %v83, 0
    %v112 = vsel %vm89, %v84, 0
    %v115 = vsel %vm89, %v85, 0
    %v118 = vsel %vm89, %v86, 0
    %v121 = vsel %vm89, %v87, 0
    %v124 = vsel %vm89, %v88, 0
    %126 = vmatprep.subr.mxu0 0.0
    %127 = vmatpush1.msra.mxu0 %v55
    %128 = vmatprep.subr.mxu0 0.0
    %129 = vmatpush1.msra.mxu0 %v56
    %130 = vmatprep.subr.mxu0 0.0
    %131 = vmatpush1.msra.mxu0 %v57
    %132 = vmatprep.subr.mxu0 0.0
    %133 = vmatpush1.msra.mxu0 %v58
    %134 = vmatprep.subr.mxu0 0.0
    %135 = vmatpush1.msra.mxu0 %v59
    %136 = vmatprep.subr.mxu0 0.0
    %137 = vmatpush1.msra.mxu0 %v60
    %138 = vmatprep.subr.mxu0 0.0
    %139 = vmatpush1.msra.mxu0 %v61
    %140 = vmatprep.subr.mxu0 0.0
    %141 = vmatpush1.msra.mxu0 %v62
    %142 = vmatprep.subr.mxu0 0.0
    %143 = vmatpush1.msra.mxu0 0.0
    %144 = vmatprep.subr.mxu0 0.0
    %145 = vmatpush1.msra.mxu0 0.0
    %146 = vmatprep.subr.mxu0 0.0
    %147 = vmatpush1.msra.mxu0 0.0
    %148 = vmatprep.subr.mxu0 0.0
    %149 = vmatpush1.msra.mxu0 0.0
    %150 = vmatprep.subr.mxu0 0.0
    %151 = vmatpush1.msra.mxu0 0.0
    %152 = vmatprep.subr.mxu0 0.0
    %153 = vmatpush1.msra.mxu0 0.0
    %154 = vmatprep.subr.mxu0 0.0
    %155 = vmatpush1.msra.mxu0 0.0
    %156 = vmatprep.subr.mxu0 0.0
    %157 = vmatpush1.msra.mxu0 0.0
    %158 = vmatprep.subr.mxu0 0.0
    %159 = vmatpush1.msra.mxu0 0.0
    %160 = vmatprep.subr.mxu0 0.0
    %161 = vmatpush1.msra.mxu0 0.0
    %162 = vmatprep.subr.mxu0 0.0
    %163 = vmatpush1.msra.mxu0 0.0
    %164 = vmatprep.subr.mxu0 0.0
    %165 = vmatpush1.msra.mxu0 0.0
    %166 = vmatprep.subr.mxu0 0.0
    %167 = vmatpush1.msra.mxu0 0.0
    %168 = vmatprep.subr.mxu0 0.0
    %169 = vmatpush1.msra.mxu0 0.0
    %170 = vmatprep.subr.mxu0 0.0
    %171 = vmatpush1.msra.mxu0 0.0
    %172 = vmatprep.subr.mxu0 0.0
    %173 = vmatpush1.msra.mxu0 0.0
    %174 = vmatprep.subr.mxu0 0.0
    %175 = vmatpush1.msra.mxu0 0.0
    %176 = vmatprep.subr.mxu0 0.0
    %177 = vmatpush1.msra.mxu0 0.0
    %178 = vmatprep.subr.mxu0 0.0
    %179 = vmatpush1.msra.mxu0 0.0
    %180 = vmatprep.subr.mxu0 0.0
    %181 = vmatpush1.msra.mxu0 0.0
    %182 = vmatprep.subr.mxu0 0.0
    %183 = vmatpush1.msra.mxu0 0.0
    %184 = vmatprep.subr.mxu0 0.0
    %185 = vmatpush1.msra.mxu0 0.0
    %186 = vmatprep.subr.mxu0 0.0
    %187 = vmatpush1.msra.mxu0 0.0
    %188 = vmatprep.subr.mxu0 0.0
    %189 = vmatpush1.msra.mxu0 0.0
    %190 = vmatprep.mubr.f32.mxu0 0.0
    %191 = vmatmul.mubr.f32.gmra.mrb[0].mxu0 %v91
    %v192 = vpop.f32.mrb[0].mxu0
    %v193 = vadd.f32 0.0, %v192
    %v194 = vpop.f32.mrb[0].mxu0
    %195 = vmatprep.mubr.f32.mxu0 0.0
    %196 = vmatmul.mubr.f32.gmra.mrb[0].mxu0 %v94
    %v197 = vpop.f32.mrb[0].mxu0
    %v198 = vadd.f32 0.0, %v197
    %v199 = vpop.f32.mrb[0].mxu0
    %200 = vmatprep.mubr.f32.mxu0 0.0
    %201 = vmatmul.mubr.f32.gmra.mrb[0].mxu0 %v97
    %v202 = vpop.f32.mrb[0].mxu0
    %v203 = vadd.f32 0.0, %v202
    %v204 = vpop.f32.mrb[0].mxu0
    %205 = vmatprep.mubr.f32.mxu0 0.0
    %206 = vmatmul.mubr.f32.gmra.mrb[0].mxu0 %v100
    %v207 = vpop.f32.mrb[0].mxu0
    %v208 = vadd.f32 0.0, %v207
    %v209 = vpop.f32.mrb[0].mxu0
    %210 = vmatprep.mubr.f32.mxu0 0.0
    %211 = vmatmul.mubr.f32.gmra.mrb[0].mxu0 %v103
    %v212 = vpop.f32.mrb[0].mxu0
    %v213 = vadd.f32 0.0, %v212
    %v214 = vpop.f32.mrb[0].mxu0
    %215 = vmatprep.mubr.f32.mxu0 0.0
    %216 = vmatmul.mubr.f32.gmra.mrb[0].mxu0 %v106
    %v217 = vpop.f32.mrb[0].mxu0
    %v218 = vadd.f32 0.0, %v217
    %v219 = vpop.f32.mrb[0].mxu0
    %220 = vmatprep.mubr.f32.mxu0 0.0
    %221 = vmatmul.mubr.f32.gmra.mrb[0].mxu0 %v109
    %v222 = vpop.f32.mrb[0].mxu0
    %v223 = vadd.f32 0.0, %v222
    %v224 = vpop.f32.mrb[0].mxu0
    %225 = vmatprep.mubr.f32.mxu0 0.0
    %226 = vmatmul.mubr.f32.gmra.mrb[0].mxu0 %v112
    %v227 = vpop.f32.mrb[0].mxu0
    %v228 = vadd.f32 0.0, %v227
    %v229 = vpop.f32.mrb[0].mxu0
    %230 = vmatprep.mubr.f32.mxu0 0.0
    %231 = vmatmul.mubr.f32.gmra.mrb[0].mxu0 %v115
    %v232 = vpop.f32.mrb[0].mxu0
    %v233 = vadd.f32 0.0, %v232
    %v234 = vpop.f32.mrb[0].mxu0
    %235 = vmatprep.mubr.f32.mxu0 0.0
    %236 = vmatmul.mubr.f32.gmra.mrb[0].mxu0 %v118
    %v237 = vpop.f32.mrb[0].mxu0
    %v238 = vadd.f32 0.0, %v237
    %v239 = vpop.f32.mrb[0].mxu0
    %240 = vmatprep.mubr.f32.mxu0 0.0
    %241 = vmatmul.mubr.f32.gmra.mrb[0].mxu0 %v121
    %v242 = vpop.f32.mrb[0].mxu0
    %v243 = vadd.f32 0.0, %v242
    %v244 = vpop.f32.mrb[0].mxu0
    %245 = vmatprep.mubr.f32.mxu0 0.0
    %246 = vmatmul.mubr.f32.gmra.mrb[0].mxu0 %v124
    %v247 = vpop.f32.mrb[0].mxu0
    %v248 = vadd.f32 0.0, %v247
    %v249 = vpop.f32.mrb[0].mxu0
    %250 = vdwg.mxu0
    %v251 = vlaneseq
    %v252 = vand.u32 %v251, 127
    %vm253 = vcmp.ge.s32.totalorder %v252, 64
    %vm254 = vcmp.lt.s32.totalorder %v252, 96
    %vm255 = vmand %vm253, %vm254
    %vm256 = vcmask 261120
    %v258 = vsel %vm256, 0.0, 0
    %260 = vmatprep.subr.mxu0 0.0
    %261 = vmatpush1.msra.mxu0 %v63
    %262 = vmatprep.subr.mxu0 0.0
    %263 = vmatpush1.msra.mxu0 %v64
    %264 = vmatprep.subr.mxu0 0.0
    %265 = vmatpush1.msra.mxu0 %v65
    %266 = vmatprep.subr.mxu0 0.0
    %267 = vmatpush1.msra.mxu0 %v66
    %268 = vmatprep.subr.mxu0 0.0
    %269 = vmatpush1.msra.mxu0 0.0
    %270 = vmatprep.subr.mxu0 0.0
    %271 = vmatpush1.msra.mxu0 0.0
    %272 = vmatprep.subr.mxu0 0.0
    %273 = vmatpush1.msra.mxu0 0.0
    %274 = vmatprep.subr.mxu0 0.0
    %275 = vmatpush1.msra.mxu0 0.0
    %276 = vmatprep.subr.mxu0 0.0
    %277 = vmatpush1.msra.mxu0 0.0
    %278 = vmatprep.subr.mxu0 0.0
    %279 = vmatpush1.msra.mxu0 0.0
    %280 = vmatprep.subr.mxu0 0.0
    %281 = vmatpush1.msra.mxu0 0.0
    %282 = vmatprep.subr.mxu0 0.0
    %283 = vmatpush1.msra.mxu0 0.0
    %284 = vmatprep.subr.mxu0 0.0
    %285 = vmatpush1.msra.mxu0 0.0
    %286 = vmatprep.subr.mxu0 0.0
    %287 = vmatpush1.msra.mxu0 0.0
    %288 = vmatprep.subr.mxu0 0.0
    %289 = vmatpush1.msra.mxu0 0.0
    %290 = vmatprep.subr.mxu0 0.0
    %291 = vmatpush1.msra.mxu0 0.0
    %292 = vmatprep.subr.mxu0 0.0
    %293 = vmatpush1.msra.mxu0 0.0
    %294 = vmatprep.subr.mxu0 0.0
    %295 = vmatpush1.msra.mxu0 0.0
    %296 = vmatprep.subr.mxu0 0.0
    %297 = vmatpush1.msra.mxu0 0.0
    %298 = vmatprep.subr.mxu0 0.0
    %299 = vmatpush1.msra.mxu0 0.0
    %300 = vmatprep.subr.mxu0 0.0
    %301 = vmatpush1.msra.mxu0 0.0
    %302 = vmatprep.subr.mxu0 0.0
    %303 = vmatpush1.msra.mxu0 0.0
    %304 = vmatprep.subr.mxu0 0.0
    %305 = vmatpush1.msra.mxu0 0.0
    %306 = vmatprep.subr.mxu0 0.0
    %307 = vmatpush1.msra.mxu0 0.0
    %308 = vmatprep.subr.mxu0 0.0
    %309 = vmatpush1.msra.mxu0 0.0
    %310 = vmatprep.subr.mxu0 0.0
    %311 = vmatpush1.msra.mxu0 0.0
    %312 = vmatprep.subr.mxu0 0.0
    %313 = vmatpush1.msra.mxu0 0.0
    %314 = vmatprep.subr.mxu0 0.0
    %315 = vmatpush1.msra.mxu0 0.0
    %316 = vmatprep.subr.mxu0 0.0
    %317 = vmatpush1.msra.mxu0 0.0
    %318 = vmatprep.subr.mxu0 0.0
    %319 = vmatpush1.msra.mxu0 0.0
    %320 = vmatprep.subr.mxu0 0.0
    %321 = vmatpush1.msra.mxu0 0.0
    %322 = vmatprep.subr.mxu0 0.0
    %323 = vmatpush1.msra.mxu0 0.0
    %324 = vmatprep.mubr.f32.mxu0 0.0
    %325 = vmatmul.mubr.f32.gmra.mrb[0].mxu0 %v258
    %v326 = vpop.f32.mrb[0].mxu0
    %v327 = vadd.f32 0.0, %v326
    %v328 = vpop.f32.mrb[0].mxu0
    %329 = vmatprep.mubr.f32.mxu0 0.0
    %330 = vmatmul.mubr.f32.gmra.mrb[0].mxu0 %v258
    %v331 = vpop.f32.mrb[0].mxu0
    %v332 = vadd.f32 0.0, %v331
    %v333 = vpop.f32.mrb[0].mxu0
    %334 = vmatprep.mubr.f32.mxu0 0.0
    %335 = vmatmul.mubr.f32.gmra.mrb[0].mxu0 %v258
    %v336 = vpop.f32.mrb[0].mxu0
    %v337 = vadd.f32 0.0, %v336
    %v338 = vpop.f32.mrb[0].mxu0
    %339 = vdwg.mxu0
    %v340 = vadd.f32 %v193, %v327
    %v341 = vadd.f32 %v198, %v332
    %v342 = vadd.f32 %v203, %v337
    %v344 = vlaneseq
    %v345 = vshrl.u32 %v344, 7
    %v346 = vsub.s32 0, %v345
    %v347 = vrot.slane %v67, %v346
    %v349 = vadd.f32 %v340, %v347
    %v350 = vadd.f32 %v341, %v347
    %v351 = vadd.f32 %v342, %v347
    %v352 = vtanh.pop %v349
    %v353 = vtanh.pop %v350
    %v354 = vtanh.pop %v351
    %v355 = vxor.u32 %v349, 2147483648
    %v356 = vxor.u32 %v350, 2147483648
    %v357 = vxor.u32 %v351, 2147483648
    %v358 = vmul.f32 %v355, 1.442695
    %v359 = vpow.pop %v358
    %v360 = vmul.f32 %v356, 1.442695
    %v361 = vpow.pop %v360
    %v362 = vmul.f32 %v357, 1.442695
    %v363 = vpow.pop %v362
    %v364 = vadd.f32 %v359, 1.0
    %v365 = vadd.f32 %v361, 1.0
    %v366 = vadd.f32 %v363, 1.0
    %v367 = vrcp.pop %v364
    %v368 = vmul.f32 1.0, %v367
    %v369 = vrcp.pop %v365
    %v370 = vmul.f32 1.0, %v369
    %v371 = vrcp.pop %v366
    %v372 = vmul.f32 1.0, %v371
    %v373 = vsel %vm255, %v352, %v368
    %v374 = vsel %vm255, %v353, %v370
    %v375 = vsel %vm255, %v354, %v372
    %v376 = vmul.f32 %v373, 0.0
    %v377 = vmul.f32 %v374, 0.0
    %v378 = vmul.f32 %v375, 0.0
    %382 = vrot.lane.b32.xlu0 %v373, 64
    %v383 = vpop.permute.xlu0 %382
    %384 = vrot.lane.b32.xlu0 %v374, 64
    %v385 = vpop.permute.xlu0 %384
    %386 = vrot.lane.b32.xlu0 %v375, 64
    %v387 = vpop.permute.xlu0 %386
    %v391 = vmul.f32 %v373, %v383
    %v392 = vmul.f32 %v374, %v385
    %v393 = vmul.f32 %v375, %v387
    %397 = vrot.lane.b32.xlu0 %v391, 32
    %v398 = vpop.permute.xlu0 %397
    %399 = vrot.lane.b32.xlu0 %v392, 32
    %v400 = vpop.permute.xlu0 %399
    %401 = vrot.lane.b32.xlu0 %v393, 32
    %v402 = vpop.permute.xlu0 %401
    %v406 = vadd.f32 %v376, %v398
    %v407 = vadd.f32 %v377, %v400
    %v408 = vadd.f32 %v378, %v402
    %v409 = vtanh.pop %v406
    %v410 = vtanh.pop %v407
    %v411 = vtanh.pop %v408
    %415 = vrot.lane.b32.xlu0 %v409, 64
    %v416 = vpop.permute.xlu0 %415
    %417 = vrot.lane.b32.xlu0 %v410, 64
    %v418 = vpop.permute.xlu0 %417
    %419 = vrot.lane.b32.xlu0 %v411, 64
    %v420 = vpop.permute.xlu0 %419
    %v424 = vmul.f32 %v373, %v416
    %v425 = vmul.f32 %v374, %v418
    %v426 = vmul.f32 %v375, %v420
    %430 = vrot.lane.b32.xlu0 %v424, 32
    %v431 = vpop.permute.xlu0 %430
    %432 = vrot.lane.b32.xlu0 %v425, 32
    %v433 = vpop.permute.xlu0 %432
    %434 = vrot.lane.b32.xlu0 %v426, 32
    %v435 = vpop.permute.xlu0 %434
    %v439 = vsel %vm256, %v431, 0.0
    %v440 = vsel %vm256, %v433, 0.0
    %v441 = vsel %vm256, %v435, 0.0
    %v443 = vlaneseq
    %v444 = vshrl.u32 %v443, 7
    %v445 = vsub.s32 0, %v444
    %v446 = vrot.slane %v76, %v445
    %v449 = vsel %vm89, %v439, 0
    %v452 = vsel %vm89, %v440, 0
    %v455 = vsel %vm89, %v441, 0
    %457 = vmatprep.subr.mxu0 0.0
    %458 = vmatpush1.msra.mxu0 %v68
    %459 = vmatprep.subr.mxu0 0.0
    %460 = vmatpush1.msra.mxu0 %v69
    %461 = vmatprep.subr.mxu0 0.0
    %462 = vmatpush1.msra.mxu0 %v70
    %463 = vmatprep.subr.mxu0 0.0
    %464 = vmatpush1.msra.mxu0 %v71
    %465 = vmatprep.subr.mxu0 0.0
    %466 = vmatpush1.msra.mxu0 %v72
    %467 = vmatprep.subr.mxu0 0.0
    %468 = vmatpush1.msra.mxu0 %v73
    %469 = vmatprep.subr.mxu0 0.0
    %470 = vmatpush1.msra.mxu0 %v74
    %471 = vmatprep.subr.mxu0 0.0
    %472 = vmatpush1.msra.mxu0 %v75
    %473 = vmatprep.subr.mxu0 0.0
    %474 = vmatpush1.msra.mxu0 0.0
    %475 = vmatprep.subr.mxu0 0.0
    %476 = vmatpush1.msra.mxu0 0.0
    %477 = vmatprep.subr.mxu0 0.0
    %478 = vmatpush1.msra.mxu0 0.0
    %479 = vmatprep.subr.mxu0 0.0
    %480 = vmatpush1.msra.mxu0 0.0
    %481 = vmatprep.subr.mxu0 0.0
    %482 = vmatpush1.msra.mxu0 0.0
    %483 = vmatprep.subr.mxu0 0.0
    %484 = vmatpush1.msra.mxu0 0.0
    %485 = vmatprep.subr.mxu0 0.0
    %486 = vmatpush1.msra.mxu0 0.0
    %487 = vmatprep.subr.mxu0 0.0
    %488 = vmatpush1.msra.mxu0 0.0
    %489 = vmatprep.subr.mxu0 0.0
    %490 = vmatpush1.msra.mxu0 0.0
    %491 = vmatprep.subr.mxu0 0.0
    %492 = vmatpush1.msra.mxu0 0.0
    %493 = vmatprep.subr.mxu0 0.0
    %494 = vmatpush1.msra.mxu0 0.0
    %495 = vmatprep.subr.mxu0 0.0
    %496 = vmatpush1.msra.mxu0 0.0
    %497 = vmatprep.subr.mxu0 0.0
    %498 = vmatpush1.msra.mxu0 0.0
    %499 = vmatprep.subr.mxu0 0.0
    %500 = vmatpush1.msra.mxu0 0.0
    %501 = vmatprep.subr.mxu0 0.0
    %502 = vmatpush1.msra.mxu0 0.0
    %503 = vmatprep.subr.mxu0 0.0
    %504 = vmatpush1.msra.mxu0 0.0
    %505 = vmatprep.subr.mxu0 0.0
    %506 = vmatpush1.msra.mxu0 0.0
    %507 = vmatprep.subr.mxu0 0.0
    %508 = vmatpush1.msra.mxu0 0.0
    %509 = vmatprep.subr.mxu0 0.0
    %510 = vmatpush1.msra.mxu0 0.0
    %511 = vmatprep.subr.mxu0 0.0
    %512 = vmatpush1.msra.mxu0 0.0
    %513 = vmatprep.subr.mxu0 0.0
    %514 = vmatpush1.msra.mxu0 0.0
    %515 = vmatprep.subr.mxu0 0.0
    %516 = vmatpush1.msra.mxu0 0.0
    %517 = vmatprep.subr.mxu0 0.0
    %518 = vmatpush1.msra.mxu0 0.0
    %519 = vmatprep.subr.mxu0 0.0
    %520 = vmatpush1.msra.mxu0 0.0
    %521 = vmatprep.mubr.f32.mxu0 0.0
    %522 = vmatmul.mubr.f32.gmra.mrb[0].mxu0 %v449
    %v523 = vpop.f32.mrb[0].mxu0
    %v524 = vadd.f32 %v446, %v523
    %v525 = vpop.f32.mrb[0].mxu0
    %526 = vmatprep.mubr.f32.mxu0 0.0
    %527 = vmatmul.mubr.f32.gmra.mrb[0].mxu0 %v452
    %v528 = vpop.f32.mrb[0].mxu0
    %v529 = vadd.f32 %v446, %v528
    %v530 = vpop.f32.mrb[0].mxu0
    %531 = vmatprep.mubr.f32.mxu0 0.0
    %532 = vmatmul.mubr.f32.gmra.mrb[0].mxu0 %v455
    %v533 = vpop.f32.mrb[0].mxu0
    %v534 = vadd.f32 %v446, %v533
    %v535 = vpop.f32.mrb[0].mxu0
    %536 = vdwg.mxu0
    %v537 = vtanh.pop %v524
    %v538 = vtanh.pop %v529
    %v539 = vtanh.pop %v534
    %v540 = vxor.u32 %v524, 2147483648
    %v541 = vxor.u32 %v529, 2147483648
    %v542 = vxor.u32 %v534, 2147483648
    %v543 = vmul.f32 %v540, 1.442695
    %v544 = vpow.pop %v543
    %v545 = vmul.f32 %v541, 1.442695
    %v546 = vpow.pop %v545
    %v547 = vmul.f32 %v542, 1.442695
    %v548 = vpow.pop %v547
    %v549 = vadd.f32 %v544, 1.0
    %v550 = vadd.f32 %v546, 1.0
    %v551 = vadd.f32 %v548, 1.0
    %v552 = vrcp.pop %v549
    %v553 = vmul.f32 1.0, %v552
    %v554 = vrcp.pop %v550
    %v555 = vmul.f32 1.0, %v554
    %v556 = vrcp.pop %v551
    %v557 = vmul.f32 1.0, %v556
    %v558 = vsel %vm255, %v537, %v553
    %v559 = vsel %vm255, %v538, %v555
    %v560 = vsel %vm255, %v539, %v557
    %v561 = vmul.f32 %v558, 0.0
    %v562 = vmul.f32 %v559, 0.0
    %v563 = vmul.f32 %v560, 0.0
    %567 = vrot.lane.b32.xlu0 %v558, 64
    %v568 = vpop.permute.xlu0 %567
    %569 = vrot.lane.b32.xlu0 %v559, 64
    %v570 = vpop.permute.xlu0 %569
    %571 = vrot.lane.b32.xlu0 %v560, 64
    %v572 = vpop.permute.xlu0 %571
    %v576 = vmul.f32 %v558, %v568
    %v577 = vmul.f32 %v559, %v570
    %v578 = vmul.f32 %v560, %v572
    %582 = vrot.lane.b32.xlu0 %v576, 32
    %v583 = vpop.permute.xlu0 %582
    %584 = vrot.lane.b32.xlu0 %v577, 32
    %v585 = vpop.permute.xlu0 %584
    %586 = vrot.lane.b32.xlu0 %v578, 32
    %v587 = vpop.permute.xlu0 %586
    %v591 = vadd.f32 %v561, %v583
    %v592 = vadd.f32 %v562, %v585
    %v593 = vadd.f32 %v563, %v587
    %v594 = vtanh.pop %v591
    %v595 = vtanh.pop %v592
    %v596 = vtanh.pop %v593
    %600 = vrot.lane.b32.xlu0 %v594, 64
    %v601 = vpop.permute.xlu0 %600
    %602 = vrot.lane.b32.xlu0 %v595, 64
    %v603 = vpop.permute.xlu0 %602
    %604 = vrot.lane.b32.xlu0 %v596, 64
    %v605 = vpop.permute.xlu0 %604
    %v609 = vmul.f32 %v558, %v601
    %v610 = vmul.f32 %v559, %v603
    %v611 = vmul.f32 %v560, %v605
    %v612 = vsel %vm256, %v431, 0
    %v614 = vsel %vm256, %v433, 0
    %v616 = vsel %vm256, %v435, 0
    %618 = vmatprep.subr.mxu0 0.0
    %619 = vmatpush1.msra.mxu0 %v63
    %620 = vmatprep.subr.mxu0 0.0
    %621 = vmatpush1.msra.mxu0 %v64
    %622 = vmatprep.subr.mxu0 0.0
    %623 = vmatpush1.msra.mxu0 %v65
    %624 = vmatprep.subr.mxu0 0.0
    %625 = vmatpush1.msra.mxu0 %v66
    %626 = vmatprep.subr.mxu0 0.0
    %627 = vmatpush1.msra.mxu0 0.0
    %628 = vmatprep.subr.mxu0 0.0
    %629 = vmatpush1.msra.mxu0 0.0
    %630 = vmatprep.subr.mxu0 0.0
    %631 = vmatpush1.msra.mxu0 0.0
    %632 = vmatprep.subr.mxu0 0.0
    %633 = vmatpush1.msra.mxu0 0.0
    %634 = vmatprep.subr.mxu0 0.0
    %635 = vmatpush1.msra.mxu0 0.0
    %636 = vmatprep.subr.mxu0 0.0
    %637 = vmatpush1.msra.mxu0 0.0
    %638 = vmatprep.subr.mxu0 0.0
    %639 = vmatpush1.msra.mxu0 0.0
    %640 = vmatprep.subr.mxu0 0.0
    %641 = vmatpush1.msra.mxu0 0.0
    %642 = vmatprep.subr.mxu0 0.0
    %643 = vmatpush1.msra.mxu0 0.0
    %644 = vmatprep.subr.mxu0 0.0
    %645 = vmatpush1.msra.mxu0 0.0
    %646 = vmatprep.subr.mxu0 0.0
    %647 = vmatpush1.msra.mxu0 0.0
    %648 = vmatprep.subr.mxu0 0.0
    %649 = vmatpush1.msra.mxu0 0.0
    %650 = vmatprep.subr.mxu0 0.0
    %651 = vmatpush1.msra.mxu0 0.0
    %652 = vmatprep.subr.mxu0 0.0
    %653 = vmatpush1.msra.mxu0 0.0
    %654 = vmatprep.subr.mxu0 0.0
    %655 = vmatpush1.msra.mxu0 0.0
    %656 = vmatprep.subr.mxu0 0.0
    %657 = vmatpush1.msra.mxu0 0.0
    %658 = vmatprep.subr.mxu0 0.0
    %659 = vmatpush1.msra.mxu0 0.0
    %660 = vmatprep.subr.mxu0 0.0
    %661 = vmatpush1.msra.mxu0 0.0
    %662 = vmatprep.subr.mxu0 0.0
    %663 = vmatpush1.msra.mxu0 0.0
    %664 = vmatprep.subr.mxu0 0.0
    %665 = vmatpush1.msra.mxu0 0.0
    %666 = vmatprep.subr.mxu0 0.0
    %667 = vmatpush1.msra.mxu0 0.0
    %668 = vmatprep.subr.mxu0 0.0
    %669 = vmatpush1.msra.mxu0 0.0
    %670 = vmatprep.subr.mxu0 0.0
    %671 = vmatpush1.msra.mxu0 0.0
    %672 = vmatprep.subr.mxu0 0.0
    %673 = vmatpush1.msra.mxu0 0.0
    %674 = vmatprep.subr.mxu0 0.0
    %675 = vmatpush1.msra.mxu0 0.0
    %676 = vmatprep.subr.mxu0 0.0
    %677 = vmatpush1.msra.mxu0 0.0
    %678 = vmatprep.subr.mxu0 0.0
    %679 = vmatpush1.msra.mxu0 0.0
    %680 = vmatprep.subr.mxu0 0.0
    %681 = vmatpush1.msra.mxu0 0.0
    %682 = vmatprep.mubr.f32.mxu0 0.0
    %683 = vmatmul.mubr.f32.gmra.mrb[0].mxu0 %v612
    %v684 = vpop.f32.mrb[0].mxu0
    %v685 = vadd.f32 0.0, %v684
    %v686 = vpop.f32.mrb[0].mxu0
    %687 = vmatprep.mubr.f32.mxu0 0.0
    %688 = vmatmul.mubr.f32.gmra.mrb[0].mxu0 %v614
    %v689 = vpop.f32.mrb[0].mxu0
    %v690 = vadd.f32 0.0, %v689
    %v691 = vpop.f32.mrb[0].mxu0
    %692 = vmatprep.mubr.f32.mxu0 0.0
    %693 = vmatmul.mubr.f32.gmra.mrb[0].mxu0 %v616
    %v694 = vpop.f32.mrb[0].mxu0
    %v695 = vadd.f32 0.0, %v694
    %v696 = vpop.f32.mrb[0].mxu0
    %697 = vdwg.mxu0
    %v698 = vadd.f32 %v208, %v685
    %v699 = vadd.f32 %v213, %v690
    %v700 = vadd.f32 %v218, %v695
    %v701 = vadd.f32 %v698, %v347
    %v702 = vadd.f32 %v699, %v347
    %v703 = vadd.f32 %v700, %v347
    %v704 = vtanh.pop %v701
    %v705 = vtanh.pop %v702
    %v706 = vtanh.pop %v703
    %v707 = vxor.u32 %v701, 2147483648
    %v708 = vxor.u32 %v702, 2147483648
    %v709 = vxor.u32 %v703, 2147483648
    %v710 = vmul.f32 %v707, 1.442695
    %v711 = vpow.pop %v710
    %v712 = vmul.f32 %v708, 1.442695
    %v713 = vpow.pop %v712
    %v714 = vmul.f32 %v709, 1.442695
    %v715 = vpow.pop %v714
    %v716 = vadd.f32 %v711, 1.0
    %v717 = vadd.f32 %v713, 1.0
    %v718 = vadd.f32 %v715, 1.0
    %v719 = vrcp.pop %v716
    %v720 = vmul.f32 1.0, %v719
    %v721 = vrcp.pop %v717
    %v722 = vmul.f32 1.0, %v721
    %v723 = vrcp.pop %v718
    %v724 = vmul.f32 1.0, %v723
    %v725 = vsel %vm255, %v704, %v720
    %v726 = vsel %vm255, %v705, %v722
    %v727 = vsel %vm255, %v706, %v724
    %v728 = vmul.f32 %v725, %v406
    %v729 = vmul.f32 %v726, %v407
    %v730 = vmul.f32 %v727, %v408
    %734 = vrot.lane.b32.xlu0 %v725, 64
    %v735 = vpop.permute.xlu0 %734
    %736 = vrot.lane.b32.xlu0 %v726, 64
    %v737 = vpop.permute.xlu0 %736
    %738 = vrot.lane.b32.xlu0 %v727, 64
    %v739 = vpop.permute.xlu0 %738
    %v743 = vmul.f32 %v725, %v735
    %v744 = vmul.f32 %v726, %v737
    %v745 = vmul.f32 %v727, %v739
    %749 = vrot.lane.b32.xlu0 %v743, 32
    %v750 = vpop.permute.xlu0 %749
    %751 = vrot.lane.b32.xlu0 %v744, 32
    %v752 = vpop.permute.xlu0 %751
    %753 = vrot.lane.b32.xlu0 %v745, 32
    %v754 = vpop.permute.xlu0 %753
    %v758 = vadd.f32 %v728, %v750
    %v759 = vadd.f32 %v729, %v752
    %v760 = vadd.f32 %v730, %v754
    %v761 = vtanh.pop %v758
    %v762 = vtanh.pop %v759
    %v763 = vtanh.pop %v760
    %767 = vrot.lane.b32.xlu0 %v761, 64
    %v768 = vpop.permute.xlu0 %767
    %769 = vrot.lane.b32.xlu0 %v762, 64
    %v770 = vpop.permute.xlu0 %769
    %771 = vrot.lane.b32.xlu0 %v763, 64
    %v772 = vpop.permute.xlu0 %771
    %v776 = vmul.f32 %v725, %v768
    %v777 = vmul.f32 %v726, %v770
    %v778 = vmul.f32 %v727, %v772
    %782 = vrot.lane.b32.xlu0 %v776, 32
    %v783 = vpop.permute.xlu0 %782
    %784 = vrot.lane.b32.xlu0 %v777, 32
    %v785 = vpop.permute.xlu0 %784
    %786 = vrot.lane.b32.xlu0 %v778, 32
    %v787 = vpop.permute.xlu0 %786
    %794 = vrot.lane.b32.xlu0 %v609, 64
    %v795 = vpop.permute.xlu0 %794
    %796 = vrot.lane.b32.xlu0 %v610, 64
    %v797 = vpop.permute.xlu0 %796
    %798 = vrot.lane.b32.xlu0 %v611, 64
    %v799 = vpop.permute.xlu0 %798
    %v803 = vsel %vm256, %v783, %v795
    %v804 = vsel %vm256, %v785, %v797
    %v805 = vsel %vm256, %v787, %v799
    %v807 = vsel %vm89, %v803, 0
    %v810 = vsel %vm89, %v804, 0
    %v813 = vsel %vm89, %v805, 0
    %815 = vmatprep.subr.mxu0 0.0
    %816 = vmatpush1.msra.mxu0 %v68
    %817 = vmatprep.subr.mxu0 0.0
    %818 = vmatpush1.msra.mxu0 %v69
    %819 = vmatprep.subr.mxu0 0.0
    %820 = vmatpush1.msra.mxu0 %v70
    %821 = vmatprep.subr.mxu0 0.0
    %822 = vmatpush1.msra.mxu0 %v71
    %823 = vmatprep.subr.mxu0 0.0
    %824 = vmatpush1.msra.mxu0 %v72
    %825 = vmatprep.subr.mxu0 0.0
    %826 = vmatpush1.msra.mxu0 %v73
    %827 = vmatprep.subr.mxu0 0.0
    %828 = vmatpush1.msra.mxu0 %v74
    %829 = vmatprep.subr.mxu0 0.0
    %830 = vmatpush1.msra.mxu0 %v75
    %831 = vmatprep.subr.mxu0 0.0
    %832 = vmatpush1.msra.mxu0 0.0
    %833 = vmatprep.subr.mxu0 0.0
    %834 = vmatpush1.msra.mxu0 0.0
    %835 = vmatprep.subr.mxu0 0.0
    %836 = vmatpush1.msra.mxu0 0.0
    %837 = vmatprep.subr.mxu0 0.0
    %838 = vmatpush1.msra.mxu0 0.0
    %839 = vmatprep.subr.mxu0 0.0
    %840 = vmatpush1.msra.mxu0 0.0
    %841 = vmatprep.subr.mxu0 0.0
    %842 = vmatpush1.msra.mxu0 0.0
    %843 = vmatprep.subr.mxu0 0.0
    %844 = vmatpush1.msra.mxu0 0.0
    %845 = vmatprep.subr.mxu0 0.0
    %846 = vmatpush1.msra.mxu0 0.0
    %847 = vmatprep.subr.mxu0 0.0
    %848 = vmatpush1.msra.mxu0 0.0
    %849 = vmatprep.subr.mxu0 0.0
    %850 = vmatpush1.msra.mxu0 0.0
    %851 = vmatprep.subr.mxu0 0.0
    %852 = vmatpush1.msra.mxu0 0.0
    %853 = vmatprep.subr.mxu0 0.0
    %854 = vmatpush1.msra.mxu0 0.0
    %855 = vmatprep.subr.mxu0 0.0
    %856 = vmatpush1.msra.mxu0 0.0
    %857 = vmatprep.subr.mxu0 0.0
    %858 = vmatpush1.msra.mxu0 0.0
    %859 = vmatprep.subr.mxu0 0.0
    %860 = vmatpush1.msra.mxu0 0.0
    %861 = vmatprep.subr.mxu0 0.0
    %862 = vmatpush1.msra.mxu0 0.0
    %863 = vmatprep.subr.mxu0 0.0
    %864 = vmatpush1.msra.mxu0 0.0
    %865 = vmatprep.subr.mxu0 0.0
    %866 = vmatpush1.msra.mxu0 0.0
    %867 = vmatprep.subr.mxu0 0.0
    %868 = vmatpush1.msra.mxu0 0.0
    %869 = vmatprep.subr.mxu0 0.0
    %870 = vmatpush1.msra.mxu0 0.0
    %871 = vmatprep.subr.mxu0 0.0
    %872 = vmatpush1.msra.mxu0 0.0
    %873 = vmatprep.subr.mxu0 0.0
    %874 = vmatpush1.msra.mxu0 0.0
    %875 = vmatprep.subr.mxu0 0.0
    %876 = vmatpush1.msra.mxu0 0.0
    %877 = vmatprep.subr.mxu0 0.0
    %878 = vmatpush1.msra.mxu0 0.0
    %879 = vmatprep.mubr.f32.mxu0 0.0
    %880 = vmatmul.mubr.f32.gmra.mrb[0].mxu0 %v807
    %v881 = vpop.f32.mrb[0].mxu0
    %v882 = vadd.f32 %v446, %v881
    %v883 = vpop.f32.mrb[0].mxu0
    %884 = vmatprep.mubr.f32.mxu0 0.0
    %885 = vmatmul.mubr.f32.gmra.mrb[0].mxu0 %v810
    %v886 = vpop.f32.mrb[0].mxu0
    %v887 = vadd.f32 %v446, %v886
    %v888 = vpop.f32.mrb[0].mxu0
    %889 = vmatprep.mubr.f32.mxu0 0.0
    %890 = vmatmul.mubr.f32.gmra.mrb[0].mxu0 %v813
    %v891 = vpop.f32.mrb[0].mxu0
    %v892 = vadd.f32 %v446, %v891
    %v893 = vpop.f32.mrb[0].mxu0
    %894 = vdwg.mxu0
    %v895 = vtanh.pop %v882
    %v896 = vtanh.pop %v887
    %v897 = vtanh.pop %v892
    %v898 = vxor.u32 %v882, 2147483648
    %v899 = vxor.u32 %v887, 2147483648
    %v900 = vxor.u32 %v892, 2147483648
    %v901 = vmul.f32 %v898, 1.442695
    %v902 = vpow.pop %v901
    %v903 = vmul.f32 %v899, 1.442695
    %v904 = vpow.pop %v903
    %v905 = vmul.f32 %v900, 1.442695
    %v906 = vpow.pop %v905
    %v907 = vadd.f32 %v902, 1.0
    %v908 = vadd.f32 %v904, 1.0
    %v909 = vadd.f32 %v906, 1.0
    %v910 = vrcp.pop %v907
    %v911 = vmul.f32 1.0, %v910
    %v912 = vrcp.pop %v908
    %v913 = vmul.f32 1.0, %v912
    %v914 = vrcp.pop %v909
    %v915 = vmul.f32 1.0, %v914
    %v916 = vsel %vm255, %v895, %v911
    %v917 = vsel %vm255, %v896, %v913
    %v918 = vsel %vm255, %v897, %v915
    %v919 = vmul.f32 %v916, %v591
    %v920 = vmul.f32 %v917, %v592
    %v921 = vmul.f32 %v918, %v593
    %925 = vrot.lane.b32.xlu0 %v916, 64
    %v926 = vpop.permute.xlu0 %925
    %927 = vrot.lane.b32.xlu0 %v917, 64
    %v928 = vpop.permute.xlu0 %927
    %929 = vrot.lane.b32.xlu0 %v918, 64
    %v930 = vpop.permute.xlu0 %929
    %v934 = vmul.f32 %v916, %v926
    %v935 = vmul.f32 %v917, %v928
    %v936 = vmul.f32 %v918, %v930
    %940 = vrot.lane.b32.xlu0 %v934, 32
    %v941 = vpop.permute.xlu0 %940
    %942 = vrot.lane.b32.xlu0 %v935, 32
    %v943 = vpop.permute.xlu0 %942
    %944 = vrot.lane.b32.xlu0 %v936, 32
    %v945 = vpop.permute.xlu0 %944
    %v949 = vadd.f32 %v919, %v941
    %v950 = vadd.f32 %v920, %v943
    %v951 = vadd.f32 %v921, %v945
    %v952 = vtanh.pop %v949
    %v953 = vtanh.pop %v950
    %v954 = vtanh.pop %v951
    %958 = vrot.lane.b32.xlu0 %v952, 64
    %v959 = vpop.permute.xlu0 %958
    %960 = vrot.lane.b32.xlu0 %v953, 64
    %v961 = vpop.permute.xlu0 %960
    %962 = vrot.lane.b32.xlu0 %v954, 64
    %v963 = vpop.permute.xlu0 %962
    %v967 = vmul.f32 %v916, %v959
    %v968 = vmul.f32 %v917, %v961
    %v969 = vmul.f32 %v918, %v963
    %v970 = vsel %vm256, %v783, 0
    %v972 = vsel %vm256, %v785, 0
    %v974 = vsel %vm256, %v787, 0
    %976 = vmatprep.subr.mxu0 0.0
    %977 = vmatpush1.msra.mxu0 %v63
    %978 = vmatprep.subr.mxu0 0.0
    %979 = vmatpush1.msra.mxu0 %v64
    %980 = vmatprep.subr.mxu0 0.0
    %981 = vmatpush1.msra.mxu0 %v65
    %982 = vmatprep.subr.mxu0 0.0
    %983 = vmatpush1.msra.mxu0 %v66
    %984 = vmatprep.subr.mxu0 0.0
    %985 = vmatpush1.msra.mxu0 0.0
    %986 = vmatprep.subr.mxu0 0.0
    %987 = vmatpush1.msra.mxu0 0.0
    %988 = vmatprep.subr.mxu0 0.0
    %989 = vmatpush1.msra.mxu0 0.0
    %990 = vmatprep.subr.mxu0 0.0
    %991 = vmatpush1.msra.mxu0 0.0
    %992 = vmatprep.subr.mxu0 0.0
    %993 = vmatpush1.msra.mxu0 0.0
    %994 = vmatprep.subr.mxu0 0.0
    %995 = vmatpush1.msra.mxu0 0.0
    %996 = vmatprep.subr.mxu0 0.0
    %997 = vmatpush1.msra.mxu0 0.0
    %998 = vmatprep.subr.mxu0 0.0
    %999 = vmatpush1.msra.mxu0 0.0
    %1000 = vmatprep.subr.mxu0 0.0
    %1001 = vmatpush1.msra.mxu0 0.0
    %1002 = vmatprep.subr.mxu0 0.0
    %1003 = vmatpush1.msra.mxu0 0.0
    %1004 = vmatprep.subr.mxu0 0.0
    %1005 = vmatpush1.msra.mxu0 0.0
    %1006 = vmatprep.subr.mxu0 0.0
    %1007 = vmatpush1.msra.mxu0 0.0
    %1008 = vmatprep.subr.mxu0 0.0
    %1009 = vmatpush1.msra.mxu0 0.0
    %1010 = vmatprep.subr.mxu0 0.0
    %1011 = vmatpush1.msra.mxu0 0.0
    %1012 = vmatprep.subr.mxu0 0.0
    %1013 = vmatpush1.msra.mxu0 0.0
    %1014 = vmatprep.subr.mxu0 0.0
    %1015 = vmatpush1.msra.mxu0 0.0
    %1016 = vmatprep.subr.mxu0 0.0
    %1017 = vmatpush1.msra.mxu0 0.0
    %1018 = vmatprep.subr.mxu0 0.0
    %1019 = vmatpush1.msra.mxu0 0.0
    %1020 = vmatprep.subr.mxu0 0.0
    %1021 = vmatpush1.msra.mxu0 0.0
    %1022 = vmatprep.subr.mxu0 0.0
    %1023 = vmatpush1.msra.mxu0 0.0
    %1024 = vmatprep.subr.mxu0 0.0
    %1025 = vmatpush1.msra.mxu0 0.0
    %1026 = vmatprep.subr.mxu0 0.0
    %1027 = vmatpush1.msra.mxu0 0.0
    %1028 = vmatprep.subr.mxu0 0.0
    %1029 = vmatpush1.msra.mxu0 0.0
    %1030 = vmatprep.subr.mxu0 0.0
    %1031 = vmatpush1.msra.mxu0 0.0
    %1032 = vmatprep.subr.mxu0 0.0
    %1033 = vmatpush1.msra.mxu0 0.0
    %1034 = vmatprep.subr.mxu0 0.0
    %1035 = vmatpush1.msra.mxu0 0.0
    %1036 = vmatprep.subr.mxu0 0.0
    %1037 = vmatpush1.msra.mxu0 0.0
    %1038 = vmatprep.subr.mxu0 0.0
    %1039 = vmatpush1.msra.mxu0 0.0
    %1040 = vmatprep.mubr.f32.mxu0 0.0
    %1041 = vmatmul.mubr.f32.gmra.mrb[0].mxu0 %v970
    %v1042 = vpop.f32.mrb[0].mxu0
    %v1043 = vadd.f32 0.0, %v1042
    %v1044 = vpop.f32.mrb[0].mxu0
    %1045 = vmatprep.mubr.f32.mxu0 0.0
    %1046 = vmatmul.mubr.f32.gmra.mrb[0].mxu0 %v972
    %v1047 = vpop.f32.mrb[0].mxu0
    %v1048 = vadd.f32 0.0, %v1047
    %v1049 = vpop.f32.mrb[0].mxu0
    %1050 = vmatprep.mubr.f32.mxu0 0.0
    %1051 = vmatmul.mubr.f32.gmra.mrb[0].mxu0 %v974
    %v1052 = vpop.f32.mrb[0].mxu0
    %v1053 = vadd.f32 0.0, %v1052
    %v1054 = vpop.f32.mrb[0].mxu0
    %1055 = vdwg.mxu0
    %v1056 = vadd.f32 %v223, %v1043
    %v1057 = vadd.f32 %v228, %v1048
    %v1058 = vadd.f32 %v233, %v1053
    %v1059 = vadd.f32 %v1056, %v347
    %v1060 = vadd.f32 %v1057, %v347
    %v1061 = vadd.f32 %v1058, %v347
    %v1062 = vtanh.pop %v1059
    %v1063 = vtanh.pop %v1060
    %v1064 = vtanh.pop %v1061
    %v1065 = vxor.u32 %v1059, 2147483648
    %v1066 = vxor.u32 %v1060, 2147483648
    %v1067 = vxor.u32 %v1061, 2147483648
    %v1068 = vmul.f32 %v1065, 1.442695
    %v1069 = vpow.pop %v1068
    %v1070 = vmul.f32 %v1066, 1.442695
    %v1071 = vpow.pop %v1070
    %v1072 = vmul.f32 %v1067, 1.442695
    %v1073 = vpow.pop %v1072
    %v1074 = vadd.f32 %v1069, 1.0
    %v1075 = vadd.f32 %v1071, 1.0
    %v1076 = vadd.f32 %v1073, 1.0
    %v1077 = vrcp.pop %v1074
    %v1078 = vmul.f32 1.0, %v1077
    %v1079 = vrcp.pop %v1075
    %v1080 = vmul.f32 1.0, %v1079
    %v1081 = vrcp.pop %v1076
    %v1082 = vmul.f32 1.0, %v1081
    %v1083 = vsel %vm255, %v1062, %v1078
    %v1084 = vsel %vm255, %v1063, %v1080
    %v1085 = vsel %vm255, %v1064, %v1082
    %v1086 = vmul.f32 %v1083, %v758
    %v1087 = vmul.f32 %v1084, %v759
    %v1088 = vmul.f32 %v1085, %v760
    %1092 = vrot.lane.b32.xlu0 %v1083, 64
    %v1093 = vpop.permute.xlu0 %1092
    %1094 = vrot.lane.b32.xlu0 %v1084, 64
    %v1095 = vpop.permute.xlu0 %1094
    %1096 = vrot.lane.b32.xlu0 %v1085, 64
    %v1097 = vpop.permute.xlu0 %1096
    %v1101 = vmul.f32 %v1083, %v1093
    %v1102 = vmul.f32 %v1084, %v1095
    %v1103 = vmul.f32 %v1085, %v1097
    %1107 = vrot.lane.b32.xlu0 %v1101, 32
    %v1108 = vpop.permute.xlu0 %1107
    %1109 = vrot.lane.b32.xlu0 %v1102, 32
    %v1110 = vpop.permute.xlu0 %1109
    %1111 = vrot.lane.b32.xlu0 %v1103, 32
    %v1112 = vpop.permute.xlu0 %1111
    %v1116 = vadd.f32 %v1086, %v1108
    %v1117 = vadd.f32 %v1087, %v1110
    %v1118 = vadd.f32 %v1088, %v1112
    %v1119 = vtanh.pop %v1116
    %v1120 = vtanh.pop %v1117
    %v1121 = vtanh.pop %v1118
    %1125 = vrot.lane.b32.xlu0 %v1119, 64
    %v1126 = vpop.permute.xlu0 %1125
    %1127 = vrot.lane.b32.xlu0 %v1120, 64
    %v1128 = vpop.permute.xlu0 %1127
    %1129 = vrot.lane.b32.xlu0 %v1121, 64
    %v1130 = vpop.permute.xlu0 %1129
    %v1134 = vmul.f32 %v1083, %v1126
    %v1135 = vmul.f32 %v1084, %v1128
    %v1136 = vmul.f32 %v1085, %v1130
    %1140 = vrot.lane.b32.xlu0 %v1134, 32
    %v1141 = vpop.permute.xlu0 %1140
    %1142 = vrot.lane.b32.xlu0 %v1135, 32
    %v1143 = vpop.permute.xlu0 %1142
    %1144 = vrot.lane.b32.xlu0 %v1136, 32
    %v1145 = vpop.permute.xlu0 %1144
    %1152 = vrot.lane.b32.xlu0 %v967, 64
    %v1153 = vpop.permute.xlu0 %1152
    %1154 = vrot.lane.b32.xlu0 %v968, 64
    %v1155 = vpop.permute.xlu0 %1154
    %1156 = vrot.lane.b32.xlu0 %v969, 64
    %v1157 = vpop.permute.xlu0 %1156
    %v1161 = vsel %vm256, %v1141, %v1153
    %v1162 = vsel %vm256, %v1143, %v1155
    %v1163 = vsel %vm256, %v1145, %v1157
    %v1165 = vsel %vm89, %v1161, 0
    %v1168 = vsel %vm89, %v1162, 0
    %v1171 = vsel %vm89, %v1163, 0
    %1173 = vmatprep.subr.mxu0 0.0
    %1174 = vmatpush1.msra.mxu0 %v68
    %1175 = vmatprep.subr.mxu0 0.0
    %1176 = vmatpush1.msra.mxu0 %v69
    %1177 = vmatprep.subr.mxu0 0.0
    %1178 = vmatpush1.msra.mxu0 %v70
    %1179 = vmatprep.subr.mxu0 0.0
    %1180 = vmatpush1.msra.mxu0 %v71
    %1181 = vmatprep.subr.mxu0 0.0
    %1182 = vmatpush1.msra.mxu0 %v72
    %1183 = vmatprep.subr.mxu0 0.0
    %1184 = vmatpush1.msra.mxu0 %v73
    %1185 = vmatprep.subr.mxu0 0.0
    %1186 = vmatpush1.msra.mxu0 %v74
    %1187 = vmatprep.subr.mxu0 0.0
    %1188 = vmatpush1.msra.mxu0 %v75
    %1189 = vmatprep.subr.mxu0 0.0
    %1190 = vmatpush1.msra.mxu0 0.0
    %1191 = vmatprep.subr.mxu0 0.0
    %1192 = vmatpush1.msra.mxu0 0.0
    %1193 = vmatprep.subr.mxu0 0.0
    %1194 = vmatpush1.msra.mxu0 0.0
    %1195 = vmatprep.subr.mxu0 0.0
    %1196 = vmatpush1.msra.mxu0 0.0
    %1197 = vmatprep.subr.mxu0 0.0
    %1198 = vmatpush1.msra.mxu0 0.0
    %1199 = vmatprep.subr.mxu0 0.0
    %1200 = vmatpush1.msra.mxu0 0.0
    %1201 = vmatprep.subr.mxu0 0.0
    %1202 = vmatpush1.msra.mxu0 0.0
    %1203 = vmatprep.subr.mxu0 0.0
    %1204 = vmatpush1.msra.mxu0 0.0
    %1205 = vmatprep.subr.mxu0 0.0
    %1206 = vmatpush1.msra.mxu0 0.0
    %1207 = vmatprep.subr.mxu0 0.0
    %1208 = vmatpush1.msra.mxu0 0.0
    %1209 = vmatprep.subr.mxu0 0.0
    %1210 = vmatpush1.msra.mxu0 0.0
    %1211 = vmatprep.subr.mxu0 0.0
    %1212 = vmatpush1.msra.mxu0 0.0
    %1213 = vmatprep.subr.mxu0 0.0
    %1214 = vmatpush1.msra.mxu0 0.0
    %1215 = vmatprep.subr.mxu0 0.0
    %1216 = vmatpush1.msra.mxu0 0.0
    %1217 = vmatprep.subr.mxu0 0.0
    %1218 = vmatpush1.msra.mxu0 0.0
    %1219 = vmatprep.subr.mxu0 0.0
    %1220 = vmatpush1.msra.mxu0 0.0
    %1221 = vmatprep.subr.mxu0 0.0
    %1222 = vmatpush1.msra.mxu0 0.0
    %1223 = vmatprep.subr.mxu0 0.0
    %1224 = vmatpush1.msra.mxu0 0.0
    %1225 = vmatprep.subr.mxu0 0.0
    %1226 = vmatpush1.msra.mxu0 0.0
    %1227 = vmatprep.subr.mxu0 0.0
    %1228 = vmatpush1.msra.mxu0 0.0
    %1229 = vmatprep.subr.mxu0 0.0
    %1230 = vmatpush1.msra.mxu0 0.0
    %1231 = vmatprep.subr.mxu0 0.0
    %1232 = vmatpush1.msra.mxu0 0.0
    %1233 = vmatprep.subr.mxu0 0.0
    %1234 = vmatpush1.msra.mxu0 0.0
    %1235 = vmatprep.subr.mxu0 0.0
    %1236 = vmatpush1.msra.mxu0 0.0
    %1237 = vmatprep.mubr.f32.mxu0 0.0
    %1238 = vmatmul.mubr.f32.gmra.mrb[0].mxu0 %v1165
    %v1239 = vpop.f32.mrb[0].mxu0
    %v1240 = vadd.f32 %v446, %v1239
    %v1241 = vpop.f32.mrb[0].mxu0
    %1242 = vmatprep.mubr.f32.mxu0 0.0
    %1243 = vmatmul.mubr.f32.gmra.mrb[0].mxu0 %v1168
    %v1244 = vpop.f32.mrb[0].mxu0
    %v1245 = vadd.f32 %v446, %v1244
    %v1246 = vpop.f32.mrb[0].mxu0
    %1247 = vmatprep.mubr.f32.mxu0 0.0
    %1248 = vmatmul.mubr.f32.gmra.mrb[0].mxu0 %v1171
    %v1249 = vpop.f32.mrb[0].mxu0
    %v1250 = vadd.f32 %v446, %v1249
    %v1251 = vpop.f32.mrb[0].mxu0
    %1252 = vdwg.mxu0
    %v1253 = vtanh.pop %v1240
    %v1254 = vtanh.pop %v1245
    %v1255 = vtanh.pop %v1250
    %v1256 = vxor.u32 %v1240, 2147483648
    %v1257 = vxor.u32 %v1245, 2147483648
    %v1258 = vxor.u32 %v1250, 2147483648
    %v1259 = vmul.f32 %v1256, 1.442695
    %v1260 = vpow.pop %v1259
    %v1261 = vmul.f32 %v1257, 1.442695
    %v1262 = vpow.pop %v1261
    %v1263 = vmul.f32 %v1258, 1.442695
    %v1264 = vpow.pop %v1263
    %v1265 = vadd.f32 %v1260, 1.0
    %v1266 = vadd.f32 %v1262, 1.0
    %v1267 = vadd.f32 %v1264, 1.0
    %v1268 = vrcp.pop %v1265
    %v1269 = vmul.f32 1.0, %v1268
    %v1270 = vrcp.pop %v1266
    %v1271 = vmul.f32 1.0, %v1270
    %v1272 = vrcp.pop %v1267
    %v1273 = vmul.f32 1.0, %v1272
    %v1274 = vsel %vm255, %v1253, %v1269
    %v1275 = vsel %vm255, %v1254, %v1271
    %v1276 = vsel %vm255, %v1255, %v1273
    %v1277 = vmul.f32 %v1274, %v949
    %v1278 = vmul.f32 %v1275, %v950
    %v1279 = vmul.f32 %v1276, %v951
    %1283 = vrot.lane.b32.xlu0 %v1274, 64
    %v1284 = vpop.permute.xlu0 %1283
    %1285 = vrot.lane.b32.xlu0 %v1275, 64
    %v1286 = vpop.permute.xlu0 %1285
    %1287 = vrot.lane.b32.xlu0 %v1276, 64
    %v1288 = vpop.permute.xlu0 %1287
    %v1292 = vmul.f32 %v1274, %v1284
    %v1293 = vmul.f32 %v1275, %v1286
    %v1294 = vmul.f32 %v1276, %v1288
    %1298 = vrot.lane.b32.xlu0 %v1292, 32
    %v1299 = vpop.permute.xlu0 %1298
    %1300 = vrot.lane.b32.xlu0 %v1293, 32
    %v1301 = vpop.permute.xlu0 %1300
    %1302 = vrot.lane.b32.xlu0 %v1294, 32
    %v1303 = vpop.permute.xlu0 %1302
    %v1307 = vadd.f32 %v1277, %v1299
    %v1308 = vadd.f32 %v1278, %v1301
    %v1309 = vadd.f32 %v1279, %v1303
    %v1310 = vtanh.pop %v1307
    %v1311 = vtanh.pop %v1308
    %v1312 = vtanh.pop %v1309
    %1316 = vrot.lane.b32.xlu0 %v1310, 64
    %v1317 = vpop.permute.xlu0 %1316
    %1318 = vrot.lane.b32.xlu0 %v1311, 64
    %v1319 = vpop.permute.xlu0 %1318
    %1320 = vrot.lane.b32.xlu0 %v1312, 64
    %v1321 = vpop.permute.xlu0 %1320
    %v1325 = vmul.f32 %v1274, %v1317
    %v1326 = vmul.f32 %v1275, %v1319
    %v1327 = vmul.f32 %v1276, %v1321
    %v1328 = vsel %vm256, %v1141, 0
    %v1330 = vsel %vm256, %v1143, 0
    %v1332 = vsel %vm256, %v1145, 0
    %1334 = vmatprep.subr.mxu0 0.0
    %1335 = vmatpush1.msra.mxu0 %v63
    %1336 = vmatprep.subr.mxu0 0.0
    %1337 = vmatpush1.msra.mxu0 %v64
    %1338 = vmatprep.subr.mxu0 0.0
    %1339 = vmatpush1.msra.mxu0 %v65
    %1340 = vmatprep.subr.mxu0 0.0
    %1341 = vmatpush1.msra.mxu0 %v66
    %1342 = vmatprep.subr.mxu0 0.0
    %1343 = vmatpush1.msra.mxu0 0.0
    %1344 = vmatprep.subr.mxu0 0.0
    %1345 = vmatpush1.msra.mxu0 0.0
    %1346 = vmatprep.subr.mxu0 0.0
    %1347 = vmatpush1.msra.mxu0 0.0
    %1348 = vmatprep.subr.mxu0 0.0
    %1349 = vmatpush1.msra.mxu0 0.0
    %1350 = vmatprep.subr.mxu0 0.0
    %1351 = vmatpush1.msra.mxu0 0.0
    %1352 = vmatprep.subr.mxu0 0.0
    %1353 = vmatpush1.msra.mxu0 0.0
    %1354 = vmatprep.subr.mxu0 0.0
    %1355 = vmatpush1.msra.mxu0 0.0
    %1356 = vmatprep.subr.mxu0 0.0
    %1357 = vmatpush1.msra.mxu0 0.0
    %1358 = vmatprep.subr.mxu0 0.0
    %1359 = vmatpush1.msra.mxu0 0.0
    %1360 = vmatprep.subr.mxu0 0.0
    %1361 = vmatpush1.msra.mxu0 0.0
    %1362 = vmatprep.subr.mxu0 0.0
    %1363 = vmatpush1.msra.mxu0 0.0
    %1364 = vmatprep.subr.mxu0 0.0
    %1365 = vmatpush1.msra.mxu0 0.0
    %1366 = vmatprep.subr.mxu0 0.0
    %1367 = vmatpush1.msra.mxu0 0.0
    %1368 = vmatprep.subr.mxu0 0.0
    %1369 = vmatpush1.msra.mxu0 0.0
    %1370 = vmatprep.subr.mxu0 0.0
    %1371 = vmatpush1.msra.mxu0 0.0
    %1372 = vmatprep.subr.mxu0 0.0
    %1373 = vmatpush1.msra.mxu0 0.0
    %1374 = vmatprep.subr.mxu0 0.0
    %1375 = vmatpush1.msra.mxu0 0.0
    %1376 = vmatprep.subr.mxu0 0.0
    %1377 = vmatpush1.msra.mxu0 0.0
    %1378 = vmatprep.subr.mxu0 0.0
    %1379 = vmatpush1.msra.mxu0 0.0
    %1380 = vmatprep.subr.mxu0 0.0
    %1381 = vmatpush1.msra.mxu0 0.0
    %1382 = vmatprep.subr.mxu0 0.0
    %1383 = vmatpush1.msra.mxu0 0.0
    %1384 = vmatprep.subr.mxu0 0.0
    %1385 = vmatpush1.msra.mxu0 0.0
    %1386 = vmatprep.subr.mxu0 0.0
    %1387 = vmatpush1.msra.mxu0 0.0
    %1388 = vmatprep.subr.mxu0 0.0
    %1389 = vmatpush1.msra.mxu0 0.0
    %1390 = vmatprep.subr.mxu0 0.0
    %1391 = vmatpush1.msra.mxu0 0.0
    %1392 = vmatprep.subr.mxu0 0.0
    %1393 = vmatpush1.msra.mxu0 0.0
    %1394 = vmatprep.subr.mxu0 0.0
    %1395 = vmatpush1.msra.mxu0 0.0
    %1396 = vmatprep.subr.mxu0 0.0
    %1397 = vmatpush1.msra.mxu0 0.0
    %1398 = vmatprep.mubr.f32.mxu0 0.0
    %1399 = vmatmul.mubr.f32.gmra.mrb[0].mxu0 %v1328
    %v1400 = vpop.f32.mrb[0].mxu0
    %v1401 = vadd.f32 0.0, %v1400
    %v1402 = vpop.f32.mrb[0].mxu0
    %1403 = vmatprep.mubr.f32.mxu0 0.0
    %1404 = vmatmul.mubr.f32.gmra.mrb[0].mxu0 %v1330
    %v1405 = vpop.f32.mrb[0].mxu0
    %v1406 = vadd.f32 0.0, %v1405
    %v1407 = vpop.f32.mrb[0].mxu0
    %1408 = vmatprep.mubr.f32.mxu0 0.0
    %1409 = vmatmul.mubr.f32.gmra.mrb[0].mxu0 %v1332
    %v1410 = vpop.f32.mrb[0].mxu0
    %v1411 = vadd.f32 0.0, %v1410
    %v1412 = vpop.f32.mrb[0].mxu0
    %1413 = vdwg.mxu0
    %v1414 = vadd.f32 %v238, %v1401
    %v1415 = vadd.f32 %v243, %v1406
    %v1416 = vadd.f32 %v248, %v1411
    %v1417 = vadd.f32 %v1414, %v347
    %v1418 = vadd.f32 %v1415, %v347
    %v1419 = vadd.f32 %v1416, %v347
    %v1420 = vtanh.pop %v1417
    %v1421 = vtanh.pop %v1418
    %v1422 = vtanh.pop %v1419
    %v1423 = vxor.u32 %v1417, 2147483648
    %v1424 = vxor.u32 %v1418, 2147483648
    %v1425 = vxor.u32 %v1419, 2147483648
    %v1426 = vmul.f32 %v1423, 1.442695
    %v1427 = vpow.pop %v1426
    %v1428 = vmul.f32 %v1424, 1.442695
    %v1429 = vpow.pop %v1428
    %v1430 = vmul.f32 %v1425, 1.442695
    %v1431 = vpow.pop %v1430
    %v1432 = vadd.f32 %v1427, 1.0
    %v1433 = vadd.f32 %v1429, 1.0
    %v1434 = vadd.f32 %v1431, 1.0
    %v1435 = vrcp.pop %v1432
    %v1436 = vmul.f32 1.0, %v1435
    %v1437 = vrcp.pop %v1433
    %v1438 = vmul.f32 1.0, %v1437
    %v1439 = vrcp.pop %v1434
    %v1440 = vmul.f32 1.0, %v1439
    %v1441 = vsel %vm255, %v1420, %v1436
    %v1442 = vsel %vm255, %v1421, %v1438
    %v1443 = vsel %vm255, %v1422, %v1440
    %v1444 = vmul.f32 %v1441, %v1116
    %v1445 = vmul.f32 %v1442, %v1117
    %v1446 = vmul.f32 %v1443, %v1118
    %1450 = vrot.lane.b32.xlu0 %v1441, 64
    %v1451 = vpop.permute.xlu0 %1450
    %1452 = vrot.lane.b32.xlu0 %v1442, 64
    %v1453 = vpop.permute.xlu0 %1452
    %1454 = vrot.lane.b32.xlu0 %v1443, 64
    %v1455 = vpop.permute.xlu0 %1454
    %v1459 = vmul.f32 %v1441, %v1451
    %v1460 = vmul.f32 %v1442, %v1453
    %v1461 = vmul.f32 %v1443, %v1455
    %1465 = vrot.lane.b32.xlu0 %v1459, 32
    %v1466 = vpop.permute.xlu0 %1465
    %1467 = vrot.lane.b32.xlu0 %v1460, 32
    %v1468 = vpop.permute.xlu0 %1467
    %1469 = vrot.lane.b32.xlu0 %v1461, 32
    %v1470 = vpop.permute.xlu0 %1469
    %v1474 = vadd.f32 %v1444, %v1466
    %v1475 = vadd.f32 %v1445, %v1468
    %v1476 = vadd.f32 %v1446, %v1470
    %v1477 = vtanh.pop %v1474
    %v1478 = vtanh.pop %v1475
    %v1479 = vtanh.pop %v1476
    %1483 = vrot.lane.b32.xlu0 %v1477, 64
    %v1484 = vpop.permute.xlu0 %1483
    %1485 = vrot.lane.b32.xlu0 %v1478, 64
    %v1486 = vpop.permute.xlu0 %1485
    %1487 = vrot.lane.b32.xlu0 %v1479, 64
    %v1488 = vpop.permute.xlu0 %1487
    %v1492 = vmul.f32 %v1441, %v1484
    %v1493 = vmul.f32 %v1442, %v1486
    %v1494 = vmul.f32 %v1443, %v1488
    %1498 = vrot.lane.b32.xlu0 %v1492, 32
    %v1499 = vpop.permute.xlu0 %1498
    %1500 = vrot.lane.b32.xlu0 %v1493, 32
    %v1501 = vpop.permute.xlu0 %1500
    %1502 = vrot.lane.b32.xlu0 %v1494, 32
    %v1503 = vpop.permute.xlu0 %1502
    %1510 = vrot.lane.b32.xlu0 %v1325, 64
    %v1511 = vpop.permute.xlu0 %1510
    %1512 = vrot.lane.b32.xlu0 %v1326, 64
    %v1513 = vpop.permute.xlu0 %1512
    %1514 = vrot.lane.b32.xlu0 %v1327, 64
    %v1515 = vpop.permute.xlu0 %1514
    %v1519 = vsel %vm256, %v1499, %v1511
    %v1520 = vsel %vm256, %v1501, %v1513
    %v1521 = vsel %vm256, %v1503, %v1515
    %v1523 = vsel %vm89, %v1519, 0
    %v1526 = vsel %vm89, %v1520, 0
    %v1529 = vsel %vm89, %v1521, 0
    %1531 = vmatprep.subr.mxu0 0.0
    %1532 = vmatpush1.msra.mxu0 %v68
    %1533 = vmatprep.subr.mxu0 0.0
    %1534 = vmatpush1.msra.mxu0 %v69
    %1535 = vmatprep.subr.mxu0 0.0
    %1536 = vmatpush1.msra.mxu0 %v70
    %1537 = vmatprep.subr.mxu0 0.0
    %1538 = vmatpush1.msra.mxu0 %v71
    %1539 = vmatprep.subr.mxu0 0.0
    %1540 = vmatpush1.msra.mxu0 %v72
    %1541 = vmatprep.subr.mxu0 0.0
    %1542 = vmatpush1.msra.mxu0 %v73
    %1543 = vmatprep.subr.mxu0 0.0
    %1544 = vmatpush1.msra.mxu0 %v74
    %1545 = vmatprep.subr.mxu0 0.0
    %1546 = vmatpush1.msra.mxu0 %v75
    %1547 = vmatprep.subr.mxu0 0.0
    %1548 = vmatpush1.msra.mxu0 0.0
    %1549 = vmatprep.subr.mxu0 0.0
    %1550 = vmatpush1.msra.mxu0 0.0
    %1551 = vmatprep.subr.mxu0 0.0
    %1552 = vmatpush1.msra.mxu0 0.0
    %1553 = vmatprep.subr.mxu0 0.0
    %1554 = vmatpush1.msra.mxu0 0.0
    %1555 = vmatprep.subr.mxu0 0.0
    %1556 = vmatpush1.msra.mxu0 0.0
    %1557 = vmatprep.subr.mxu0 0.0
    %1558 = vmatpush1.msra.mxu0 0.0
    %1559 = vmatprep.subr.mxu0 0.0
    %1560 = vmatpush1.msra.mxu0 0.0
    %1561 = vmatprep.subr.mxu0 0.0
    %1562 = vmatpush1.msra.mxu0 0.0
    %1563 = vmatprep.subr.mxu0 0.0
    %1564 = vmatpush1.msra.mxu0 0.0
    %1565 = vmatprep.subr.mxu0 0.0
    %1566 = vmatpush1.msra.mxu0 0.0
    %1567 = vmatprep.subr.mxu0 0.0
    %1568 = vmatpush1.msra.mxu0 0.0
    %1569 = vmatprep.subr.mxu0 0.0
    %1570 = vmatpush1.msra.mxu0 0.0
    %1571 = vmatprep.subr.mxu0 0.0
    %1572 = vmatpush1.msra.mxu0 0.0
    %1573 = vmatprep.subr.mxu0 0.0
    %1574 = vmatpush1.msra.mxu0 0.0
    %1575 = vmatprep.subr.mxu0 0.0
    %1576 = vmatpush1.msra.mxu0 0.0
    %1577 = vmatprep.subr.mxu0 0.0
    %1578 = vmatpush1.msra.mxu0 0.0
    %1579 = vmatprep.subr.mxu0 0.0
    %1580 = vmatpush1.msra.mxu0 0.0
    %1581 = vmatprep.subr.mxu0 0.0
    %1582 = vmatpush1.msra.mxu0 0.0
    %1583 = vmatprep.subr.mxu0 0.0
    %1584 = vmatpush1.msra.mxu0 0.0
    %1585 = vmatprep.subr.mxu0 0.0
    %1586 = vmatpush1.msra.mxu0 0.0
    %1587 = vmatprep.subr.mxu0 0.0
    %1588 = vmatpush1.msra.mxu0 0.0
    %1589 = vmatprep.subr.mxu0 0.0
    %1590 = vmatpush1.msra.mxu0 0.0
    %1591 = vmatprep.subr.mxu0 0.0
    %1592 = vmatpush1.msra.mxu0 0.0
    %1593 = vmatprep.subr.mxu0 0.0
    %1594 = vmatpush1.msra.mxu0 0.0
    %1595 = vmatprep.mubr.f32.mxu0 0.0
    %1596 = vmatmul.mubr.f32.gmra.mrb[0].mxu0 %v1523
    %v1597 = vpop.f32.mrb[0].mxu0
    %v1598 = vadd.f32 %v446, %v1597
    %v1599 = vpop.f32.mrb[0].mxu0
    %1600 = vmatprep.mubr.f32.mxu0 0.0
    %1601 = vmatmul.mubr.f32.gmra.mrb[0].mxu0 %v1526
    %v1602 = vpop.f32.mrb[0].mxu0
    %v1603 = vadd.f32 %v446, %v1602
    %v1604 = vpop.f32.mrb[0].mxu0
    %1605 = vmatprep.mubr.f32.mxu0 0.0
    %1606 = vmatmul.mubr.f32.gmra.mrb[0].mxu0 %v1529
    %v1607 = vpop.f32.mrb[0].mxu0
    %v1608 = vadd.f32 %v446, %v1607
    %v1609 = vpop.f32.mrb[0].mxu0
    %1610 = vdwg.mxu0
    %v1611 = vtanh.pop %v1598
    %v1612 = vtanh.pop %v1603
    %v1613 = vtanh.pop %v1608
    %v1614 = vxor.u32 %v1598, 2147483648
    %v1615 = vxor.u32 %v1603, 2147483648
    %v1616 = vxor.u32 %v1608, 2147483648
    %v1617 = vmul.f32 %v1614, 1.442695
    %v1618 = vpow.pop %v1617
    %v1619 = vmul.f32 %v1615, 1.442695
    %v1620 = vpow.pop %v1619
    %v1621 = vmul.f32 %v1616, 1.442695
    %v1622 = vpow.pop %v1621
    %v1623 = vadd.f32 %v1618, 1.0
    %v1624 = vadd.f32 %v1620, 1.0
    %v1625 = vadd.f32 %v1622, 1.0
    %v1626 = vrcp.pop %v1623
    %v1627 = vmul.f32 1.0, %v1626
    %v1628 = vrcp.pop %v1624
    %v1629 = vmul.f32 1.0, %v1628
    %v1630 = vrcp.pop %v1625
    %v1631 = vmul.f32 1.0, %v1630
    %v1632 = vsel %vm255, %v1611, %v1627
    %v1633 = vsel %vm255, %v1612, %v1629
    %v1634 = vsel %vm255, %v1613, %v1631
    %v1635 = vmul.f32 %v1632, %v1307
    %v1636 = vmul.f32 %v1633, %v1308
    %v1637 = vmul.f32 %v1634, %v1309
    %1641 = vrot.lane.b32.xlu0 %v1632, 64
    %v1642 = vpop.permute.xlu0 %1641
    %1643 = vrot.lane.b32.xlu0 %v1633, 64
    %v1644 = vpop.permute.xlu0 %1643
    %1645 = vrot.lane.b32.xlu0 %v1634, 64
    %v1646 = vpop.permute.xlu0 %1645
    %v1650 = vmul.f32 %v1632, %v1642
    %v1651 = vmul.f32 %v1633, %v1644
    %v1652 = vmul.f32 %v1634, %v1646
    %1656 = vrot.lane.b32.xlu0 %v1650, 32
    %v1657 = vpop.permute.xlu0 %1656
    %1658 = vrot.lane.b32.xlu0 %v1651, 32
    %v1659 = vpop.permute.xlu0 %1658
    %1660 = vrot.lane.b32.xlu0 %v1652, 32
    %v1661 = vpop.permute.xlu0 %1660
    %v1665 = vadd.f32 %v1635, %v1657
    %v1666 = vadd.f32 %v1636, %v1659
    %v1667 = vadd.f32 %v1637, %v1661
    %v1668 = vtanh.pop %v1665
    %v1669 = vtanh.pop %v1666
    %v1670 = vtanh.pop %v1667
    %1674 = vrot.lane.b32.xlu0 %v1668, 64
    %v1675 = vpop.permute.xlu0 %1674
    %1676 = vrot.lane.b32.xlu0 %v1669, 64
    %v1677 = vpop.permute.xlu0 %1676
    %1678 = vrot.lane.b32.xlu0 %v1670, 64
    %v1679 = vpop.permute.xlu0 %1678
    %v1683 = vmul.f32 %v1632, %v1675
    %v1684 = vmul.f32 %v1633, %v1677
    %v1685 = vmul.f32 %v1634, %v1679
    %1687 = vrot.lane.b32.xlu0 %v1683, 32
    %v1688 = vpop.permute.xlu0 %1687
    %1691 = vrot.lane.b32.xlu0 %v1684, 64
    %v1692 = vpop.permute.xlu0 %1691
    %1695 = vrot.lane.b32.xlu0 %v1685, 96
    %v1696 = vpop.permute.xlu0 %1695
    %v1698 = vsel %vm256, %v1688, %v1692
    %v1699 = vsel %vm89, %v1698, %v1696
    %v1700 = vld [vmem:[%s5] sm:$0xff]
    %v1701 = vld [vmem:[%s5 + $0x8] sm:$0xff]
    %v1702 = vld [vmem:[%s5 + $0x10] sm:$0xff]
    %v1703 = vld [vmem:[%s5 + $0x18] sm:$0xff]
    %v1704 = vld [vmem:[%s5 + $0x20] sm:$0xff]
    %v1705 = vld [vmem:[%s5 + $0x28] sm:$0xff]
    %v1706 = vld [vmem:[%s5 + $0x30] sm:$0xff]
    %v1707 = vld [vmem:[%s5 + $0x38] sm:$0xff]
    %v1708 = vld [vmem:[%s5 + $0x40] sm:$0xff]
    %v1709 = vld [vmem:[%s5 + $0x48] sm:$0xff]
    %v1710 = vld [vmem:[%s5 + $0x50] sm:$0xff]
    %v1711 = vld [vmem:[%s5 + $0x58] sm:$0xff]
    %v1712 = vld [vmem:[%s6] sm:$0x1]
    %v1714 = vlaneseq
    %v1715 = vshrl.u32 %v1714, 7
    %v1716 = vsub.s32 0, %v1715
    %v1717 = vrot.slane %v1712, %v1716
    %vm1719 = vcmask 785408
    %v1721 = vsel %vm1719, %v1699, 0
    %1723 = vmatprep.subr.mxu0 0.0
    %1724 = vmatpush1.msra.mxu0 %v1700
    %1725 = vmatprep.subr.mxu0 0.0
    %1726 = vmatpush1.msra.mxu0 %v1701
    %1727 = vmatprep.subr.mxu0 0.0
    %1728 = vmatpush1.msra.mxu0 %v1702
    %1729 = vmatprep.subr.mxu0 0.0
    %1730 = vmatpush1.msra.mxu0 %v1703
    %1731 = vmatprep.subr.mxu0 0.0
    %1732 = vmatpush1.msra.mxu0 %v1704
    %1733 = vmatprep.subr.mxu0 0.0
    %1734 = vmatpush1.msra.mxu0 %v1705
    %1735 = vmatprep.subr.mxu0 0.0
    %1736 = vmatpush1.msra.mxu0 %v1706
    %1737 = vmatprep.subr.mxu0 0.0
    %1738 = vmatpush1.msra.mxu0 %v1707
    %1739 = vmatprep.subr.mxu0 0.0
    %1740 = vmatpush1.msra.mxu0 %v1708
    %1741 = vmatprep.subr.mxu0 0.0
    %1742 = vmatpush1.msra.mxu0 %v1709
    %1743 = vmatprep.subr.mxu0 0.0
    %1744 = vmatpush1.msra.mxu0 %v1710
    %1745 = vmatprep.subr.mxu0 0.0
    %1746 = vmatpush1.msra.mxu0 %v1711
    %1747 = vmatprep.subr.mxu0 0.0
    %1748 = vmatpush1.msra.mxu0 0.0
    %1749 = vmatprep.subr.mxu0 0.0
    %1750 = vmatpush1.msra.mxu0 0.0
    %1751 = vmatprep.subr.mxu0 0.0
    %1752 = vmatpush1.msra.mxu0 0.0
    %1753 = vmatprep.subr.mxu0 0.0
    %1754 = vmatpush1.msra.mxu0 0.0
    %1755 = vmatprep.subr.mxu0 0.0
    %1756 = vmatpush1.msra.mxu0 0.0
    %1757 = vmatprep.subr.mxu0 0.0
    %1758 = vmatpush1.msra.mxu0 0.0
    %1759 = vmatprep.subr.mxu0 0.0
    %1760 = vmatpush1.msra.mxu0 0.0
    %1761 = vmatprep.subr.mxu0 0.0
    %1762 = vmatpush1.msra.mxu0 0.0
    %1763 = vmatprep.subr.mxu0 0.0
    %1764 = vmatpush1.msra.mxu0 0.0
    %1765 = vmatprep.subr.mxu0 0.0
    %1766 = vmatpush1.msra.mxu0 0.0
    %1767 = vmatprep.subr.mxu0 0.0
    %1768 = vmatpush1.msra.mxu0 0.0
    %1769 = vmatprep.subr.mxu0 0.0
    %1770 = vmatpush1.msra.mxu0 0.0
    %1771 = vmatprep.subr.mxu0 0.0
    %1772 = vmatpush1.msra.mxu0 0.0
    %1773 = vmatprep.subr.mxu0 0.0
    %1774 = vmatpush1.msra.mxu0 0.0
    %1775 = vmatprep.subr.mxu0 0.0
    %1776 = vmatpush1.msra.mxu0 0.0
    %1777 = vmatprep.subr.mxu0 0.0
    %1778 = vmatpush1.msra.mxu0 0.0
    %1779 = vmatprep.subr.mxu0 0.0
    %1780 = vmatpush1.msra.mxu0 0.0
    %1781 = vmatprep.subr.mxu0 0.0
    %1782 = vmatpush1.msra.mxu0 0.0
    %1783 = vmatprep.subr.mxu0 0.0
    %1784 = vmatpush1.msra.mxu0 0.0
    %1785 = vmatprep.subr.mxu0 0.0
    %1786 = vmatpush1.msra.mxu0 0.0
    %1787 = vmatprep.mubr.f32.mxu0 0.0
    %1788 = vmatmul.mubr.f32.gmra.mrb[0].mxu0 %v1721
    %v1789 = vpop.f32.mrb[0].mxu0
    %v1790 = vadd.f32 %v1717, %v1789
    %v1791 = vpop.f32.mrb[0].mxu0
    %1792 = vdwg.mxu0
    %vm1793 = vcmask 130048
    %v1794 = vsel %vm1793, %v1790, -inf
    %1795 = vmax.xlane.f32.xlu0 %v1794
    %v1796 = vpop.xlane.xlu0 %1795
    %v1797 = vsub.f32 %v1790, %v1796
    %v1798 = vmul.f32 %v1797, 1.442695
    %v1799 = vpow.pop %v1798
    %v1800 = vsel %vm1793, %v1799, 0.0
    %1801 = vadd.xlane.f32.xlu0 %v1800
    %v1802 = vpop.xlane.xlu0 %1801
    %v1803 = vlog2.pop %v1802
    %v1804 = vmul.f32 %v1803, 0.6931472
    %v1805 = vsub.f32 %v1797, %v1804
    %1806 = vst.msk [vmem:[#allocation7] sm:$0xff] %vm1793, %v1805
    // Predicated region
    $region38: #{tpu_custom_call.1} parent=1 // pred_check
      _
    $region39: #{tpu_custom_call.1} parent=1 // pred_check_branch
      %1808 = sbr.rel (0) target = $region41
    $region40: #{tpu_custom_call.1} parent=1 // pred_region
      %s1810 = ssub.s32 128, 128
      %1811 = vsyncadd [#allocation4], %s1810
      %s1813 = sshll.u32 [#allocation7], 4
      %s1814 = int_to_ptr.vmem [resolvable:$true] %s1813
      %1816 = dma.vmem_to_hbm [thread:$0]  %s1814, 128, %s7, [#allocation4]
    $region41: #{tpu_custom_call.1} parent=1 // pred_fallthru
      _
    // Predicated region
    $region42: #{tpu_custom_call.1} parent=1 // pred_check
      _
    $region43: #{tpu_custom_call.1} parent=1 // pred_check_branch
      %1818 = sbr.rel (0) target = $region45
    $region44: #{tpu_custom_call.1} parent=1 // pred_region
      %1819 = dma.done [#allocation4], 128
    $region45: #{tpu_custom_call.1} parent=1 // pred_fallthru
      _
    %1820 = vsyncpa [#allocation3], 1
    %1821 = vsyncpa [#allocation6], 1
    %1822 = vsyncpa [#allocation4], 1

</llo_original>
